<compile_context>
chip_gen: v6e
topology: v6e:2x2x1
jax: 0.10.0
libtpu: 0.0.40
codegen_flags: <defaults>
</compile_context>

<pallas_src>
import functools
import math

import numpy as np

import jax
import jax.numpy as jnp
from jax.experimental import pallas as pl
from jax.experimental.pallas import tpu as pltpu


def _round_up(a: int, b: int) -> int:
    return ((a + b - 1) // b) * b


def _num_tensorcores() -> int:
    """Best-effort TensorCore count per chip (v7x has 2, v5e/v6e have 1)."""
    try:
        kind = jax.devices()[0].device_kind.lower()
    except Exception:
        return 1
    return 2 if "v7" in kind else 1


# ----------------------------------------------------------------------------
# ProgressiveBandFrequency encoding
# ----------------------------------------------------------------------------
def _pbf_kernel(*refs, apply_mask: bool, num_split: int):
    """refs (with mask):    mask(1,Dp), phase(1,Dp), G(S*Ci,Dp) bf16, x(T,Ci), o(T,Dp)
       refs (without mask): phase, G, x, o
    """
    if apply_mask:
        mask_ref, phase_ref, g_ref, x_ref, o_ref = refs
    else:
        phase_ref, g_ref, x_ref, o_ref = refs
        mask_ref = None

    x = x_ref[...]                                  # (T, row_in) float32

    # Exact bf16 decomposition of x: h1 (+ h2 (+ h3)) == x to ~2^-25 relative,
    # every part exactly representable in bf16, so the bf16 routing matmul
    # below is lossless (G's nonzeros are exact powers of two).
    h1 = x.astype(jnp.bfloat16)
    parts = [h1]
    r = x - h1.astype(jnp.float32)
    if num_split >= 2:
        h2 = r.astype(jnp.bfloat16)
        parts.append(h2)
        if num_split >= 3:
            r = r - h2.astype(jnp.float32)
            parts.append(r.astype(jnp.bfloat16))

    # ONE stacked matmul: accumulation of the split happens inside the MXU
    # (no f32 vector adds, no extra result-FIFO pops).
    hs = jnp.concatenate(parts, axis=-1)            # (T, num_split*row_in) bf16
    z = jnp.dot(hs, g_ref[...], preferred_element_type=jnp.float32)
    # z[t, L] == freq[f(L)] * x[t, point(L)*C + channel(L)]   (to ~1 ulp)

    y = jnp.sin(z + phase_ref[...])                 # cos(t) == sin(t + pi/2)
    if apply_mask:
        y = y * mask_ref[...]
    o_ref[...] = y.astype(o_ref.dtype)


def progressive_band_frequency(
    x,
    mask=None,
    *,
    n_frequencies: int,
    points_per_row: int | None = None,
    vmem_budget_bytes: int = 24 << 20,
    out_dtype=jnp.float32,
    min_grid_steps: int | None = None,
):
    """x: (..., C) -> (..., C * 2 * n_frequencies).

    Output ordering matches the torch module: [sin(f0 x), cos(f0 x), sin(f1 x),
    cos(f1 x), ...], each block C wide, multiplied by the per-frequency mask
    (all ones when mask is None).  Compute is float32; out_dtype=bfloat16
    halves output HBM traffic (recommended when feeding the tcnn MLP).
    """
    orig_shape = x.shape
    C = int(orig_shape[-1])
    Nf = int(n_frequencies)
    out_dim = 2 * Nf * C

    x2 = jnp.asarray(x, jnp.float32).reshape(-1, C)
    N = x2.shape[0]

    # ---- lane-dense packing: R points per physical row (row_in % 128 == 0) --
    if points_per_row is None:
        R = max(1, 128 // math.gcd(C, 128))
    else:
        R = int(points_per_row)
    row_in = R * C
    row_out = R * out_dim

    out_itemsize = jnp.dtype(out_dtype).itemsize
    # bf16 output only needs a 2-way split (residual ~2^-17 << bf16 quantum).
    num_split = 2 if out_itemsize < 4 else 3

    # ---- pad only to a multiple of 8 packed rows (sublane alignment), never
    #      to a multiple of the tile size; skip the pad entirely if unneeded --
    rows = -(-N // R)
    rows_pad = _round_up(max(rows, 8), 8)
    n_pad = rows_pad * R
    if n_pad != N:
        x2 = jnp.pad(x2, ((0, n_pad - N), (0, 0)))
    xp = x2.reshape(rows_pad, row_in)               # free row-major repack

    # ---- static per-lane tables ---------------------------------------------
    freqs = 2.0 ** np.arange(Nf, dtype=np.float64)  # == 2**linspace(0,Nf-1,Nf)
    exps = np.log2(freqs)
    assert np.all(freqs > 0) and np.all(exps == np.round(exps)) and np.all(
        np.abs(exps) < 126
    ), "frequencies must be exact powers of two for the lossless bf16 routing"

    col = np.arange(row_out)
    d = col % out_dim                 # position within one point's encoding
    f_idx = d // (2 * C)              # frequency index
    s_idx = (d // C) % 2              # 0 = sin, 1 = cos
    c_idx = d % C                     # channel
    r_idx = col // out_dim            # point slot within the packed row

    # One-hot routing matrix with the frequency folded in, stacked num_split
    # times along the contraction axis so a single matmul handles the split.
    G = np.zeros((row_in, row_out), np.float32)
    G[r_idx * C + c_idx, col] = freqs[f_idx]
    g_mat = jnp.asarray(np.concatenate([G] * num_split, axis=0), dtype=jnp.bfloat16)

    phase_row = jnp.asarray(
        (s_idx * (np.pi / 2.0)).astype(np.float32).reshape(1, row_out)
    )

    # ---- tile size from a VMEM byte budget ----------------------------------
    const_bytes = g_mat.size * 2 + 2 * row_out * 4          # G + phase (+ mask)
    bytes_per_row = row_in * 4 + row_out * out_itemsize     # one in + one out buf
    t_budget = max(8, (vmem_budget_bytes - 2 * const_bytes) // (2 * bytes_per_row))
    T = max(8, (int(t_budget) // 8) * 8)

    if min_grid_steps is None:
        min_grid_steps = 2 if _num_tensorcores() >= 2 else 1
    if min_grid_steps > 1:
        T = min(T, max(8, _round_up(-(-rows_pad // min_grid_steps), 8)))
    T = min(T, rows_pad)
    grid0 = pl.cdiv(rows_pad, T)      # last block may be partial (writes clipped)

    apply_mask = mask is not None
    inputs, in_specs = [], []
    if apply_mask:
        mask_row = jnp.asarray(mask, jnp.float32)[jnp.asarray(f_idx)].reshape(1, row_out)
        inputs.append(mask_row)
        in_specs.append(pl.BlockSpec((1, row_out), lambda i: (0, 0)))
    inputs += [phase_row, g_mat, xp]
    in_specs += [
        pl.BlockSpec((1, row_out), lambda i: (0, 0)),                    # phase
        pl.BlockSpec((num_split * row_in, row_out), lambda i: (0, 0)),   # G (const)
        pl.BlockSpec((T, row_in), lambda i: (i, 0)),                     # x tile
    ]

    cost = pl.CostEstimate(
        flops=2 * rows_pad * (num_split * row_in) * row_out + 4 * rows_pad * row_out,
        transcendentals=rows_pad * row_out,
        bytes_accessed=rows_pad * row_in * 4
        + rows_pad * row_out * out_itemsize
        + int(const_bytes),
    )
    vmem_limit = int(
        min(64 << 20, max(32 << 20, 2 * T * bytes_per_row + 2 * const_bytes + (4 << 20)))
    )

    out_packed = pl.pallas_call(
        functools.partial(_pbf_kernel, apply_mask=apply_mask, num_split=num_split),
        out_shape=jax.ShapeDtypeStruct((rows_pad, row_out), out_dtype),
        grid=(grid0,),
        in_specs=in_specs,
        out_specs=pl.BlockSpec((T, row_out), lambda i: (i, 0)),
        compiler_params=pltpu.CompilerParams(
            dimension_semantics=("parallel",),
            vmem_limit_bytes=vmem_limit,
        ),
        cost_estimate=cost,
    )(*inputs)

    out = out_packed.reshape(n_pad, out_dim)[:N]    # free row-major unpack + unpad
    return out.reshape(*orig_shape[:-1], out_dim)


def progressive_band_frequency_ref(x, mask, *, n_frequencies):
    """Pure-JAX reference reproducing the torch forward exactly."""
    freq_bands = 2.0 ** jnp.linspace(0.0, n_frequencies - 1, n_frequencies)
    outs = []
    for f in range(n_frequencies):
        for func in (jnp.sin, jnp.cos):
            outs.append(func(freq_bands[f] * x) * mask[f])
    return jnp.concatenate(outs, axis=-1)


# ----------------------------------------------------------------------------
# TCNNNetwork.forward — fused MLP, float32 output
# ----------------------------------------------------------------------------
def _tcnn_mlp_kernel(x_ref, *rest):
    *w_refs, o_ref = rest
    h = x_ref[...].astype(jnp.bfloat16)
    for w_ref in w_refs[:-1]:
        h = jnp.dot(h, w_ref[...], preferred_element_type=jnp.float32)
        h = jnp.maximum(h, 0.0).astype(jnp.bfloat16)        # ReLU hidden
    o_ref[...] = jnp.dot(
        h, w_refs[-1][...], preferred_element_type=jnp.float32
    ).astype(o_ref.dtype)                                    # linear out, .float()


def tcnn_network_forward(x, weights, *, tile_rows: int = 1024):
    """TCNNNetwork.forward: `network(x).float()` with a fused-MLP network.

    weights: list of (d_i, d_{i+1}) matrices (no biases, tcnn-style).
    Hidden layers use ReLU; activations are half precision; output is float32.
    """
    orig_shape = x.shape
    dim_in = int(orig_shape[-1])
    dim_out = int(weights[-1].shape[1])

    x2 = jnp.asarray(x).reshape(-1, dim_in)
    N = x2.shape[0]
    rows_pad = _round_up(max(N, 8), 8)
    if rows_pad != N:
        x2 = jnp.pad(x2, ((0, rows_pad - N), (0, 0)))

    T = min(_round_up(tile_rows, 8), rows_pad)
    grid0 = pl.cdiv(rows_pad, T)

    ws = [jnp.asarray(w, jnp.bfloat16) for w in weights]
    in_specs = [pl.BlockSpec((T, dim_in), lambda i: (i, 0))]
    in_specs += [pl.BlockSpec(tuple(w.shape), lambda i: (0, 0)) for w in ws]

    out = pl.pallas_call(
        _tcnn_mlp_kernel,
        out_shape=jax.ShapeDtypeStruct((rows_pad, dim_out), jnp.float32),
        grid=(grid0,),
        in_specs=in_specs,
        out_specs=pl.BlockSpec((T, dim_out), lambda i: (i, 0)),
        compiler_params=pltpu.CompilerParams(dimension_semantics=("parallel",)),
    )(x2, *ws)
    return out[:N].reshape(*orig_shape[:-1], dim_out)


def tcnn_network_ref(x, weights):
    h = jnp.asarray(x).astype(jnp.bfloat16)
    for w in weights[:-1]:
        h = jnp.maximum(
            jnp.dot(h, jnp.asarray(w, jnp.bfloat16), preferred_element_type=jnp.float32),
            0.0,
        ).astype(jnp.bfloat16)
    return jnp.dot(
        h, jnp.asarray(weights[-1], jnp.bfloat16), preferred_element_type=jnp.float32
    )


if __name__ == "__main__":
    in_channels = 4
    n_frequencies = 4
    k0, k1, k2, k3 = jax.random.split(jax.random.PRNGKey(0), 4)

    # --- frequency encoding: 123 points/batch (ragged vs the packing factor),
    #     non-trivial mask, f32 output -------------------------------------
    x = jax.random.normal(k0, (2, 123, in_channels), dtype=jnp.float32)
    mask = jnp.asarray([1.0, 1.0, 0.5, 0.0], dtype=jnp.float32)
    out = jax.block_until_ready(
        progressive_band_frequency(x, mask, n_frequencies=n_frequencies)
    )
    ref = progressive_band_frequency_ref(x, mask, n_frequencies=n_frequencies)
    assert out.shape == (2, 123, in_channels * 2 * n_frequencies)
    assert jnp.allclose(out, ref, atol=1e-4, rtol=1e-4), float(jnp.max(jnp.abs(out - ref)))

    # --- mask=None (all ones), bf16 output (2-way split path, no pad path) --
    x2 = jax.random.normal(k1, (2, 128, in_channels), dtype=jnp.float32)
    out_bf16 = jax.block_until_ready(
        progressive_band_frequency(
            x2, None, n_frequencies=n_frequencies, out_dtype=jnp.bfloat16
        )
    )
    ref2 = progressive_band_frequency_ref(
        x2, jnp.ones((n_frequencies,), jnp.float32), n_frequencies=n_frequencies
    )
    assert out_bf16.dtype == jnp.bfloat16
    assert jnp.allclose(out_bf16.astype(jnp.float32), ref2, atol=2e-2, rtol=2e-2)

    # --- TCNNNetwork: dim_in=32 (encoding width), n_neurons=64, 2 hidden
    #     layers, dim_out=16, float32 output --------------------------------
    dim_in, n_neurons, dim_out = 32, 64, 16
    w_shapes = [(dim_in, n_neurons), (n_neurons, n_neurons), (n_neurons, dim_out)]
    wkeys = jax.random.split(k2, len(w_shapes))
    weights = [
        (jax.random.normal(wk, s, dtype=jnp.float32) / np.sqrt(s[0])).astype(jnp.bfloat16)
        for wk, s in zip(wkeys, w_shapes)
    ]
    x_mlp = jax.random.normal(k3, (2, 123, dim_in), dtype=jnp.float32)
    y = jax.block_until_ready(tcnn_network_forward(x_mlp, weights))
    y_ref = tcnn_network_ref(x_mlp, weights)
    assert y.shape == (2, 123, dim_out) and y.dtype == jnp.float32
    assert jnp.allclose(y, y_ref, atol=5e-2, rtol=5e-2), float(jnp.max(jnp.abs(y - y_ref)))

    print("KERNEL_OK")
</pallas_src>

<mosaic_0001>
module attributes {stable_mosaic.version = 11 : i64} {
  func.func @_pbf_kernel(%arg0: i32, %arg1: memref<1x1024xf32, #tpu.memory_space<vmem>>, %arg2: memref<1x1024xf32, #tpu.memory_space<vmem>>, %arg3: memref<384x1024xbf16, #tpu.memory_space<vmem>>, %arg4: memref<8x128xf32, #tpu.memory_space<vmem>>, %arg5: memref<8x1024xf32, #tpu.memory_space<vmem>>) attributes {dimension_semantics = [#tpu.dimension_semantics<parallel>], iteration_bounds = array<i64: 1>, scalar_prefetch = 0 : i64, scratch_operands = 0 : i64, tpu.core_type = #tpu.core_type<tc>, window_params = [{pipeline_mode = #tpu.pipeline_mode<synchronous>, transform_indices = @transform_0, window_bounds = array<i64: 1, 1024>}, {pipeline_mode = #tpu.pipeline_mode<synchronous>, transform_indices = @transform_1, window_bounds = array<i64: 1, 1024>}, {pipeline_mode = #tpu.pipeline_mode<synchronous>, transform_indices = @transform_2, window_bounds = array<i64: 384, 1024>}, {transform_indices = @transform_3, window_bounds = array<i64: 8, 128>}, {transform_indices = @transform_4, window_bounds = array<i64: 8, 1024>}]} {
    %c0 = arith.constant 0 : index
    %c0_0 = arith.constant 0 : index
    %0 = vector.load %arg4[%c0, %c0_0] : memref<8x128xf32, #tpu.memory_space<vmem>>, vector<8x128xf32>
    %1 = arith.truncf %0 : vector<8x128xf32> to vector<8x128xbf16>
    %2 = arith.extf %1 : vector<8x128xbf16> to vector<8x128xf32>
    %3 = arith.subf %0, %2 : vector<8x128xf32>
    %4 = arith.truncf %3 : vector<8x128xf32> to vector<8x128xbf16>
    %5 = arith.extf %4 : vector<8x128xbf16> to vector<8x128xf32>
    %6 = arith.subf %3, %5 : vector<8x128xf32>
    %7 = arith.truncf %6 : vector<8x128xf32> to vector<8x128xbf16>
    %8 = tpu.concatenate %1, %4, %7 in 1 : vector<8x128xbf16>, vector<8x128xbf16>, vector<8x128xbf16> -> vector<8x384xbf16>
    %c0_1 = arith.constant 0 : index
    %c0_2 = arith.constant 0 : index
    %9 = vector.load %arg3[%c0_1, %c0_2] : memref<384x1024xbf16, #tpu.memory_space<vmem>>, vector<384x1024xbf16>
    %cst = arith.constant dense<0.000000e+00> : vector<8x1024xf32>
    %10 = tpu.matmul %8, %9, %cst {dimension_numbers = #tpu.dot_dimension_numbers<[1], [0], [0], [1], [0, 0, 1, 1], [], []>} : vector<8x384xbf16>, vector<384x1024xbf16>, vector<8x1024xf32> -> vector<8x1024xf32>
    %c0_3 = arith.constant 0 : index
    %c0_4 = arith.constant 0 : index
    %11 = vector.load %arg2[%c0_3, %c0_4] : memref<1x1024xf32, #tpu.memory_space<vmem>>, vector<1x1024xf32>
    %12 = vector.broadcast %11 : vector<1x1024xf32> to vector<8x1024xf32>
    %13 = arith.addf %10, %12 : vector<8x1024xf32>
    %14 = math.sin %13 : vector<8x1024xf32>
    %c0_5 = arith.constant 0 : index
    %c0_6 = arith.constant 0 : index
    %15 = vector.load %arg1[%c0_5, %c0_6] : memref<1x1024xf32, #tpu.memory_space<vmem>>, vector<1x1024xf32>
    %16 = vector.broadcast %15 : vector<1x1024xf32> to vector<8x1024xf32>
    %17 = arith.mulf %14, %16 : vector<8x1024xf32>
    %c0_7 = arith.constant 0 : index
    %c0_8 = arith.constant 0 : index
    %18 = vector.load %arg5[%c0_7, %c0_8] : memref<8x1024xf32, #tpu.memory_space<vmem>>, vector<8x1024xf32>
    tpu.vector_store %arg5[%c0_7, %c0_8], %17 {strides = array<i32>} : memref<8x1024xf32, #tpu.memory_space<vmem>>, vector<8x1024xf32>,
    return
  }
  func.func @transform_0(%arg0: i32) -> (i32, i32) {
    %c0_i32 = arith.constant 0 : i32
    %c0_i32_0 = arith.constant 0 : i32
    %c0_i32_1 = arith.constant 0 : i32
    return %c0_i32, %c0_i32_0 : i32, i32
  }
  func.func @transform_1(%arg0: i32) -> (i32, i32) {
    %c0_i32 = arith.constant 0 : i32
    %c0_i32_0 = arith.constant 0 : i32
    %c0_i32_1 = arith.constant 0 : i32
    return %c0_i32, %c0_i32_0 : i32, i32
  }
  func.func @transform_2(%arg0: i32) -> (i32, i32) {
    %c0_i32 = arith.constant 0 : i32
    %c0_i32_0 = arith.constant 0 : i32
    %c0_i32_1 = arith.constant 0 : i32
    return %c0_i32, %c0_i32_0 : i32, i32
  }
  func.func @transform_3(%arg0: i32) -> (i32, i32) {
    %c0_i32 = arith.constant 0 : i32
    %c0_i32_0 = arith.constant 0 : i32
    return %arg0, %c0_i32 : i32, i32
  }
  func.func @transform_4(%arg0: i32) -> (i32, i32) {
    %c0_i32 = arith.constant 0 : i32
    %c0_i32_0 = arith.constant 0 : i32
    return %arg0, %c0_i32 : i32, i32
  }
}

</mosaic_0001>

<llo_original>
// kernel: tpu_custom_call.1
$region0: #{tpu_custom_call.1}
  #allocation0 [shape = 'u32[]', space=smem, size = 0x4, offset = 0x4, fixed_abs, tag = 'smem constant byte address 0x4 - core index']
  #allocation1 [shape = 'u32[144,128]{1,0:T(1,128)}', space=vmem, size = 0x12000, scoped, tag = 'internal scratch']
  %s0 = inlined_call_operand.hbm [shape: f32[1,1024], index: 0, kind: input, shape index: {}]
  %s1 = inlined_call_operand.hbm [shape: f32[1,1024], index: 1, kind: input, shape index: {}]
  %s2 = inlined_call_operand.hbm [shape: bf16[384,1024], index: 2, kind: input, shape index: {}]
  %s3 = inlined_call_operand.hbm [shape: f32[8,128], index: 3, kind: input, shape index: {}]
  %s4 = inlined_call_operand.hbm [shape: f32[8,1024], index: 4, kind: output, shape index: {}]
  %s5 = sld [smem:[#allocation0]]
  $region42: #{tpu_custom_call.1} parent=0
    _
  %s7 = ssub.s32 1, %s5
  %s8 = scalar_select 0, %s7, %s5
  $region1: #{tpu_custom_call.1} parent=0
    #allocation2 [shape = 'u8[4096]{0}', space=vmem, size = 0x1000, scoped, tag = 'input window, operand 0, single buffered']
    #allocation3 [shape = 's32[1]{0}', space=sflag, size = 0x4, scoped, tag = 'scoped memory for tpu_custom_call.1']
    #allocation4 [shape = 's32[1]{0}', space=sflag, size = 0x4, scoped, tag = 'scoped memory for tpu_custom_call.1']
    #allocation5 [shape = 'u8[4096]{0}', space=vmem, size = 0x1000, scoped, tag = 'input window, operand 1, single buffered']
    #allocation6 [shape = 's32[1]{0}', space=sflag, size = 0x4, scoped, tag = 'scoped memory for tpu_custom_call.1']
    #allocation7 [shape = 'u8[786432]{0}', space=vmem, size = 0xc0000, scoped, tag = 'input window, operand 2, single buffered']
    #allocation8 [shape = 'u8[4096]{0}', space=vmem, size = 0x1000, scoped, tag = 'input window, operand 3, single buffered']
    #allocation9 [shape = 's32[1]{0}', space=sflag, size = 0x4, scoped, tag = 'scoped memory for tpu_custom_call.1']
    #allocation10 [shape = 'u8[32768]{0}', space=vmem, size = 0x8000, scoped, tag = 'output window, operand 0, single buffered']
    %9 = vsyncpa [#allocation3], 0
    %10 = vsyncpa [#allocation6], 0
    %11 = vsyncpa [#allocation9], 0
    %12 = vsyncpa [#allocation4], 0
    // Predicated region
    $region2: #{tpu_custom_call.1} parent=1 // pred_check
      _
    $region3: #{tpu_custom_call.1} parent=1 // pred_check_branch
      %14 = sbr.rel (0) target = $region5
    $region4: #{tpu_custom_call.1} parent=1 // pred_region
      %s16 = ssub.s32 128, 128
      %17 = vsyncadd [#allocation3], %s16
      %s19 = sshll.u32 [#allocation2], 4
      %s20 = int_to_ptr.vmem [resolvable:$true] %s19
      %22 = dma.hbm_to_vmem [thread:$0]  %s0, 128, %s20, [#allocation3]
    $region5: #{tpu_custom_call.1} parent=1 // pred_fallthru
      _
    // Predicated region
    $region6: #{tpu_custom_call.1} parent=1 // pred_check
      _
    $region7: #{tpu_custom_call.1} parent=1 // pred_check_branch
      %24 = sbr.rel (0) target = $region9
    $region8: #{tpu_custom_call.1} parent=1 // pred_region
      %s26 = ssub.s32 128, 128
      %27 = vsyncadd [#allocation6], %s26
      %s29 = sshll.u32 [#allocation5], 4
      %s30 = int_to_ptr.vmem [resolvable:$true] %s29
      %32 = dma.hbm_to_vmem [thread:$0]  %s1, 128, %s30, [#allocation6]
    $region9: #{tpu_custom_call.1} parent=1 // pred_fallthru
      _
    // Predicated region
    $region10: #{tpu_custom_call.1} parent=1 // pred_check
      _
    $region11: #{tpu_custom_call.1} parent=1 // pred_check_branch
      %34 = sbr.rel (0) target = $region13
    $region12: #{tpu_custom_call.1} parent=1 // pred_region
      %s36 = ssub.s32 24576, 24576
      %37 = vsyncadd [#allocation6], %s36
      %s38 = sshll.u32 [#allocation7], 4
      %s39 = int_to_ptr.vmem [resolvable:$true] %s38
      %44 = dma.hbm_to_vmem [thread:$0]  %s2, 24576, %s39, [#allocation6], 512, 512, 32
    $region13: #{tpu_custom_call.1} parent=1 // pred_fallthru
      _
    // Predicated region
    $region14: #{tpu_custom_call.1} parent=1 // pred_check
      _
    $region15: #{tpu_custom_call.1} parent=1 // pred_check_branch
      %46 = sbr.rel (0) target = $region17
    $region16: #{tpu_custom_call.1} parent=1 // pred_region
      %s48 = ssub.s32 128, 128
      %49 = vsyncadd [#allocation9], %s48
      %s51 = sshll.u32 [#allocation8], 4
      %s52 = int_to_ptr.vmem [resolvable:$true] %s51
      %54 = dma.hbm_to_vmem [thread:$0]  %s3, 128, %s52, [#allocation9]
    $region17: #{tpu_custom_call.1} parent=1 // pred_fallthru
      _
    // Predicated region
    $region18: #{tpu_custom_call.1} parent=1 // pred_check
      _
    $region19: #{tpu_custom_call.1} parent=1 // pred_check_branch
      %56 = sbr.rel (0) target = $region21
    $region20: #{tpu_custom_call.1} parent=1 // pred_region
      %57 = dma.done [#allocation3], 128
    $region21: #{tpu_custom_call.1} parent=1 // pred_fallthru
      _
    // Predicated region
    $region22: #{tpu_custom_call.1} parent=1 // pred_check
      _
    $region23: #{tpu_custom_call.1} parent=1 // pred_check_branch
      %59 = sbr.rel (0) target = $region25
    $region24: #{tpu_custom_call.1} parent=1 // pred_region
      %60 = dma.done [#allocation6], 128
    $region25: #{tpu_custom_call.1} parent=1 // pred_fallthru
      _
    // Predicated region
    $region26: #{tpu_custom_call.1} parent=1 // pred_check
      _
    $region27: #{tpu_custom_call.1} parent=1 // pred_check_branch
      %62 = sbr.rel (0) target = $region29
    $region28: #{tpu_custom_call.1} parent=1 // pred_region
      %63 = dma.done [#allocation6], 24576
    $region29: #{tpu_custom_call.1} parent=1 // pred_fallthru
      _
    // Predicated region
    $region30: #{tpu_custom_call.1} parent=1 // pred_check
      _
    $region31: #{tpu_custom_call.1} parent=1 // pred_check_branch
      %65 = sbr.rel (0) target = $region33
    $region32: #{tpu_custom_call.1} parent=1 // pred_region
      %66 = dma.done [#allocation9], 128
    $region33: #{tpu_custom_call.1} parent=1 // pred_fallthru
      _
    %v68 = vld [vmem:[#allocation8] sm:$0xff]
    %v69 = vpack.c.bf16 %v68, %v68
    %v70 = vunpack.c.l.bf16 %v69
    %v71 = vsub.f32 %v68, %v70
    %v72 = vpack.c.bf16 %v71, %v71
    %v73 = vunpack.c.l.bf16 %v72
    %v74 = vsub.f32 %v71, %v73
    %v75 = vpack.c.bf16 %v74, %v74
    %v76 = vld [vmem:[#allocation7] sm:$0xff]
    %v77 = vld [vmem:[#allocation7 + $0x8] sm:$0xff]
    %v78 = vld [vmem:[#allocation7 + $0x10] sm:$0xff]
    %v79 = vld [vmem:[#allocation7 + $0x18] sm:$0xff]
    %v80 = vld [vmem:[#allocation7 + $0x20] sm:$0xff]
    %v81 = vld [vmem:[#allocation7 + $0x28] sm:$0xff]
    %v82 = vld [vmem:[#allocation7 + $0x30] sm:$0xff]
    %v83 = vld [vmem:[#allocation7 + $0x38] sm:$0xff]
    %v84 = vld [vmem:[#allocation7 + $0x40] sm:$0xff]
    %v85 = vld [vmem:[#allocation7 + $0x48] sm:$0xff]
    %v86 = vld [vmem:[#allocation7 + $0x50] sm:$0xff]
    %v87 = vld [vmem:[#allocation7 + $0x58] sm:$0xff]
    %v88 = vld [vmem:[#allocation7 + $0x60] sm:$0xff]
    %v89 = vld [vmem:[#allocation7 + $0x68] sm:$0xff]
    %v90 = vld [vmem:[#allocation7 + $0x70] sm:$0xff]
    %v91 = vld [vmem:[#allocation7 + $0x78] sm:$0xff]
    %v92 = vld [vmem:[#allocation7 + $0x80] sm:$0xff]
    %v93 = vld [vmem:[#allocation7 + $0x88] sm:$0xff]
    %v94 = vld [vmem:[#allocation7 + $0x90] sm:$0xff]
    %v95 = vld [vmem:[#allocation7 + $0x98] sm:$0xff]
    %v96 = vld [vmem:[#allocation7 + $0xa0] sm:$0xff]
    %v97 = vld [vmem:[#allocation7 + $0xa8] sm:$0xff]
    %v98 = vld [vmem:[#allocation7 + $0xb0] sm:$0xff]
    %v99 = vld [vmem:[#allocation7 + $0xb8] sm:$0xff]
    %v100 = vld [vmem:[#allocation7 + $0xc0] sm:$0xff]
    %v101 = vld [vmem:[#allocation7 + $0xc8] sm:$0xff]
    %v102 = vld [vmem:[#allocation7 + $0xd0] sm:$0xff]
    %v103 = vld [vmem:[#allocation7 + $0xd8] sm:$0xff]
    %v104 = vld [vmem:[#allocation7 + $0xe0] sm:$0xff]
    %v105 = vld [vmem:[#allocation7 + $0xe8] sm:$0xff]
    %v106 = vld [vmem:[#allocation7 + $0xf0] sm:$0xff]
    %v107 = vld [vmem:[#allocation7 + $0xf8] sm:$0xff]
    %v108 = vld [vmem:[#allocation7 + $0x100] sm:$0xff]
    %v109 = vld [vmem:[#allocation7 + $0x108] sm:$0xff]
    %v110 = vld [vmem:[#allocation7 + $0x110] sm:$0xff]
    %v111 = vld [vmem:[#allocation7 + $0x118] sm:$0xff]
    %v112 = vld [vmem:[#allocation7 + $0x120] sm:$0xff]
    %v113 = vld [vmem:[#allocation7 + $0x128] sm:$0xff]
    %v114 = vld [vmem:[#allocation7 + $0x130] sm:$0xff]
    %v115 = vld [vmem:[#allocation7 + $0x138] sm:$0xff]
    %v116 = vld [vmem:[#allocation7 + $0x140] sm:$0xff]
    %v117 = vld [vmem:[#allocation7 + $0x148] sm:$0xff]
    %v118 = vld [vmem:[#allocation7 + $0x150] sm:$0xff]
    %v119 = vld [vmem:[#allocation7 + $0x158] sm:$0xff]
    %v120 = vld [vmem:[#allocation7 + $0x160] sm:$0xff]
    %v121 = vld [vmem:[#allocation7 + $0x168] sm:$0xff]
    %v122 = vld [vmem:[#allocation7 + $0x170] sm:$0xff]
    %v123 = vld [vmem:[#allocation7 + $0x178] sm:$0xff]
    %v124 = vld [vmem:[#allocation7 + $0x180] sm:$0xff]
    %v125 = vld [vmem:[#allocation7 + $0x188] sm:$0xff]
    %v126 = vld [vmem:[#allocation7 + $0x190] sm:$0xff]
    %v127 = vld [vmem:[#allocation7 + $0x198] sm:$0xff]
    %v128 = vld [vmem:[#allocation7 + $0x1a0] sm:$0xff]
    %v129 = vld [vmem:[#allocation7 + $0x1a8] sm:$0xff]
    %v130 = vld [vmem:[#allocation7 + $0x1b0] sm:$0xff]
    %v131 = vld [vmem:[#allocation7 + $0x1b8] sm:$0xff]
    %v132 = vld [vmem:[#allocation7 + $0x1c0] sm:$0xff]
    %v133 = vld [vmem:[#allocation7 + $0x1c8] sm:$0xff]
    %v134 = vld [vmem:[#allocation7 + $0x1d0] sm:$0xff]
    %v135 = vld [vmem:[#allocation7 + $0x1d8] sm:$0xff]
    %v136 = vld [vmem:[#allocation7 + $0x1e0] sm:$0xff]
    %v137 = vld [vmem:[#allocation7 + $0x1e8] sm:$0xff]
    %v138 = vld [vmem:[#allocation7 + $0x1f0] sm:$0xff]
    %v139 = vld [vmem:[#allocation7 + $0x1f8] sm:$0xff]
    %v140 = vld [vmem:[#allocation7 + $0x200] sm:$0xff]
    %v141 = vld [vmem:[#allocation7 + $0x208] sm:$0xff]
    %v142 = vld [vmem:[#allocation7 + $0x210] sm:$0xff]
    %v143 = vld [vmem:[#allocation7 + $0x218] sm:$0xff]
    %v144 = vld [vmem:[#allocation7 + $0x220] sm:$0xff]
    %v145 = vld [vmem:[#allocation7 + $0x228] sm:$0xff]
    %v146 = vld [vmem:[#allocation7 + $0x230] sm:$0xff]
    %v147 = vld [vmem:[#allocation7 + $0x238] sm:$0xff]
    %v148 = vld [vmem:[#allocation7 + $0x240] sm:$0xff]
    %v149 = vld [vmem:[#allocation7 + $0x248] sm:$0xff]
    %v150 = vld [vmem:[#allocation7 + $0x250] sm:$0xff]
    %v151 = vld [vmem:[#allocation7 + $0x258] sm:$0xff]
    %v152 = vld [vmem:[#allocation7 + $0x260] sm:$0xff]
    %v153 = vld [vmem:[#allocation7 + $0x268] sm:$0xff]
    %v154 = vld [vmem:[#allocation7 + $0x270] sm:$0xff]
    %v155 = vld [vmem:[#allocation7 + $0x278] sm:$0xff]
    %v156 = vld [vmem:[#allocation7 + $0x280] sm:$0xff]
    %v157 = vld [vmem:[#allocation7 + $0x288] sm:$0xff]
    %v158 = vld [vmem:[#allocation7 + $0x290] sm:$0xff]
    %v159 = vld [vmem:[#allocation7 + $0x298] sm:$0xff]
    %v160 = vld [vmem:[#allocation7 + $0x2a0] sm:$0xff]
    %v161 = vld [vmem:[#allocation7 + $0x2a8] sm:$0xff]
    %v162 = vld [vmem:[#allocation7 + $0x2b0] sm:$0xff]
    %v163 = vld [vmem:[#allocation7 + $0x2b8] sm:$0xff]
    %v164 = vld [vmem:[#allocation7 + $0x2c0] sm:$0xff]
    %v165 = vld [vmem:[#allocation7 + $0x2c8] sm:$0xff]
    %v166 = vld [vmem:[#allocation7 + $0x2d0] sm:$0xff]
    %v167 = vld [vmem:[#allocation7 + $0x2d8] sm:$0xff]
    %v168 = vld [vmem:[#allocation7 + $0x2e0] sm:$0xff]
    %v169 = vld [vmem:[#allocation7 + $0x2e8] sm:$0xff]
    %v170 = vld [vmem:[#allocation7 + $0x2f0] sm:$0xff]
    %v171 = vld [vmem:[#allocation7 + $0x2f8] sm:$0xff]
    %v172 = vld [vmem:[#allocation7 + $0x300] sm:$0xff]
    %v173 = vld [vmem:[#allocation7 + $0x308] sm:$0xff]
    %v174 = vld [vmem:[#allocation7 + $0x310] sm:$0xff]
    %v175 = vld [vmem:[#allocation7 + $0x318] sm:$0xff]
    %v176 = vld [vmem:[#allocation7 + $0x320] sm:$0xff]
    %v177 = vld [vmem:[#allocation7 + $0x328] sm:$0xff]
    %v178 = vld [vmem:[#allocation7 + $0x330] sm:$0xff]
    %v179 = vld [vmem:[#allocation7 + $0x338] sm:$0xff]
    %v180 = vld [vmem:[#allocation7 + $0x340] sm:$0xff]
    %v181 = vld [vmem:[#allocation7 + $0x348] sm:$0xff]
    %v182 = vld [vmem:[#allocation7 + $0x350] sm:$0xff]
    %v183 = vld [vmem:[#allocation7 + $0x358] sm:$0xff]
    %v184 = vld [vmem:[#allocation7 + $0x360] sm:$0xff]
    %v185 = vld [vmem:[#allocation7 + $0x368] sm:$0xff]
    %v186 = vld [vmem:[#allocation7 + $0x370] sm:$0xff]
    %v187 = vld [vmem:[#allocation7 + $0x378] sm:$0xff]
    %v188 = vld [vmem:[#allocation7 + $0x380] sm:$0xff]
    %v189 = vld [vmem:[#allocation7 + $0x388] sm:$0xff]
    %v190 = vld [vmem:[#allocation7 + $0x390] sm:$0xff]
    %v191 = vld [vmem:[#allocation7 + $0x398] sm:$0xff]
    %v192 = vld [vmem:[#allocation7 + $0x3a0] sm:$0xff]
    %v193 = vld [vmem:[#allocation7 + $0x3a8] sm:$0xff]
    %v194 = vld [vmem:[#allocation7 + $0x3b0] sm:$0xff]
    %v195 = vld [vmem:[#allocation7 + $0x3b8] sm:$0xff]
    %v196 = vld [vmem:[#allocation7 + $0x3c0] sm:$0xff]
    %v197 = vld [vmem:[#allocation7 + $0x3c8] sm:$0xff]
    %v198 = vld [vmem:[#allocation7 + $0x3d0] sm:$0xff]
    %v199 = vld [vmem:[#allocation7 + $0x3d8] sm:$0xff]
    %v200 = vld [vmem:[#allocation7 + $0x3e0] sm:$0xff]
    %v201 = vld [vmem:[#allocation7 + $0x3e8] sm:$0xff]
    %v202 = vld [vmem:[#allocation7 + $0x3f0] sm:$0xff]
    %v203 = vld [vmem:[#allocation7 + $0x3f8] sm:$0xff]
    %v204 = vld [vmem:[#allocation7 + $0x400] sm:$0xff]
    %v205 = vld [vmem:[#allocation7 + $0x408] sm:$0xff]
    %v206 = vld [vmem:[#allocation7 + $0x410] sm:$0xff]
    %v207 = vld [vmem:[#allocation7 + $0x418] sm:$0xff]
    %v208 = vld [vmem:[#allocation7 + $0x420] sm:$0xff]
    %v209 = vld [vmem:[#allocation7 + $0x428] sm:$0xff]
    %v210 = vld [vmem:[#allocation7 + $0x430] sm:$0xff]
    %v211 = vld [vmem:[#allocation7 + $0x438] sm:$0xff]
    %v212 = vld [vmem:[#allocation7 + $0x440] sm:$0xff]
    %v213 = vld [vmem:[#allocation7 + $0x448] sm:$0xff]
    %v214 = vld [vmem:[#allocation7 + $0x450] sm:$0xff]
    %v215 = vld [vmem:[#allocation7 + $0x458] sm:$0xff]
    %v216 = vld [vmem:[#allocation7 + $0x460] sm:$0xff]
    %v217 = vld [vmem:[#allocation7 + $0x468] sm:$0xff]
    %v218 = vld [vmem:[#allocation7 + $0x470] sm:$0xff]
    %v219 = vld [vmem:[#allocation7 + $0x478] sm:$0xff]
    %v220 = vld [vmem:[#allocation7 + $0x480] sm:$0xff]
    %v221 = vld [vmem:[#allocation7 + $0x488] sm:$0xff]
    %v222 = vld [vmem:[#allocation7 + $0x490] sm:$0xff]
    %v223 = vld [vmem:[#allocation7 + $0x498] sm:$0xff]
    %v224 = vld [vmem:[#allocation7 + $0x4a0] sm:$0xff]
    %v225 = vld [vmem:[#allocation7 + $0x4a8] sm:$0xff]
    %v226 = vld [vmem:[#allocation7 + $0x4b0] sm:$0xff]
    %v227 = vld [vmem:[#allocation7 + $0x4b8] sm:$0xff]
    %v228 = vld [vmem:[#allocation7 + $0x4c0] sm:$0xff]
    %v229 = vld [vmem:[#allocation7 + $0x4c8] sm:$0xff]
    %v230 = vld [vmem:[#allocation7 + $0x4d0] sm:$0xff]
    %v231 = vld [vmem:[#allocation7 + $0x4d8] sm:$0xff]
    %v232 = vld [vmem:[#allocation7 + $0x4e0] sm:$0xff]
    %v233 = vld [vmem:[#allocation7 + $0x4e8] sm:$0xff]
    %v234 = vld [vmem:[#allocation7 + $0x4f0] sm:$0xff]
    %v235 = vld [vmem:[#allocation7 + $0x4f8] sm:$0xff]
    %v236 = vld [vmem:[#allocation7 + $0x500] sm:$0xff]
    %v237 = vld [vmem:[#allocation7 + $0x508] sm:$0xff]
    %v238 = vld [vmem:[#allocation7 + $0x510] sm:$0xff]
    %v239 = vld [vmem:[#allocation7 + $0x518] sm:$0xff]
    %v240 = vld [vmem:[#allocation7 + $0x520] sm:$0xff]
    %v241 = vld [vmem:[#allocation7 + $0x528] sm:$0xff]
    %v242 = vld [vmem:[#allocation7 + $0x530] sm:$0xff]
    %v243 = vld [vmem:[#allocation7 + $0x538] sm:$0xff]
    %v244 = vld [vmem:[#allocation7 + $0x540] sm:$0xff]
    %v245 = vld [vmem:[#allocation7 + $0x548] sm:$0xff]
    %v246 = vld [vmem:[#allocation7 + $0x550] sm:$0xff]
    %v247 = vld [vmem:[#allocation7 + $0x558] sm:$0xff]
    %v248 = vld [vmem:[#allocation7 + $0x560] sm:$0xff]
    %v249 = vld [vmem:[#allocation7 + $0x568] sm:$0xff]
    %v250 = vld [vmem:[#allocation7 + $0x570] sm:$0xff]
    %v251 = vld [vmem:[#allocation7 + $0x578] sm:$0xff]
    %v252 = vld [vmem:[#allocation7 + $0x580] sm:$0xff]
    %v253 = vld [vmem:[#allocation7 + $0x588] sm:$0xff]
    %v254 = vld [vmem:[#allocation7 + $0x590] sm:$0xff]
    %v255 = vld [vmem:[#allocation7 + $0x598] sm:$0xff]
    %v256 = vld [vmem:[#allocation7 + $0x5a0] sm:$0xff]
    %v257 = vld [vmem:[#allocation7 + $0x5a8] sm:$0xff]
    %v258 = vld [vmem:[#allocation7 + $0x5b0] sm:$0xff]
    %v259 = vld [vmem:[#allocation7 + $0x5b8] sm:$0xff]
    %v260 = vld [vmem:[#allocation7 + $0x5c0] sm:$0xff]
    %v261 = vld [vmem:[#allocation7 + $0x5c8] sm:$0xff]
    %v262 = vld [vmem:[#allocation7 + $0x5d0] sm:$0xff]
    %v263 = vld [vmem:[#allocation7 + $0x5d8] sm:$0xff]
    %v264 = vld [vmem:[#allocation7 + $0x5e0] sm:$0xff]
    %v265 = vld [vmem:[#allocation7 + $0x5e8] sm:$0xff]
    %v266 = vld [vmem:[#allocation7 + $0x5f0] sm:$0xff]
    %v267 = vld [vmem:[#allocation7 + $0x5f8] sm:$0xff]
    %v268 = vld [vmem:[#allocation5] sm:$0xff]
    %v270 = vlaneseq
    %v271 = vshrl.u32 %v270, 7
    %v272 = vsub.s32 0, %v271
    %v273 = vrot.slane %v268, %v272
    %v274 = vlaneseq
    %v275 = vshrl.u32 %v274, 7
    %v276 = vsub.s32 1, %v275
    %v277 = vrot.slane %v268, %v276
    %v278 = vlaneseq
    %v279 = vshrl.u32 %v278, 7
    %v280 = vsub.s32 2, %v279
    %v281 = vrot.slane %v268, %v280
    %v282 = vlaneseq
    %v283 = vshrl.u32 %v282, 7
    %v284 = vsub.s32 3, %v283
    %v285 = vrot.slane %v268, %v284
    %v286 = vlaneseq
    %v287 = vshrl.u32 %v286, 7
    %v288 = vsub.s32 4, %v287
    %v289 = vrot.slane %v268, %v288
    %v290 = vlaneseq
    %v291 = vshrl.u32 %v290, 7
    %v292 = vsub.s32 5, %v291
    %v293 = vrot.slane %v268, %v292
    %v294 = vlaneseq
    %v295 = vshrl.u32 %v294, 7
    %v296 = vsub.s32 6, %v295
    %v297 = vrot.slane %v268, %v296
    %v298 = vlaneseq
    %v299 = vshrl.u32 %v298, 7
    %v300 = vsub.s32 7, %v299
    %v301 = vrot.slane %v268, %v300
    %v502 = vunpack.c.l.b16 %v76
    %v503 = vunpack.c.h.b16 %v76
    %v504 = vunpack.c.l.b16 %v77
    %v505 = vunpack.c.h.b16 %v77
    %v506 = vunpack.c.l.b16 %v78
    %v507 = vunpack.c.h.b16 %v78
    %v508 = vunpack.c.l.b16 %v79
    %v509 = vunpack.c.h.b16 %v79
    %v510 = vunpack.c.l.b16 %v80
    %v511 = vunpack.c.h.b16 %v80
    %v512 = vunpack.c.l.b16 %v81
    %v513 = vunpack.c.h.b16 %v81
    %v514 = vunpack.c.l.b16 %v82
    %v515 = vunpack.c.h.b16 %v82
    %v516 = vunpack.c.l.b16 %v83
    %v517 = vunpack.c.h.b16 %v83
    %v518 = vunpack.c.l.b16 %v84
    %v519 = vunpack.c.h.b16 %v84
    %v520 = vunpack.c.l.b16 %v85
    %v521 = vunpack.c.h.b16 %v85
    %v522 = vunpack.c.l.b16 %v86
    %v523 = vunpack.c.h.b16 %v86
    %v524 = vunpack.c.l.b16 %v87
    %v525 = vunpack.c.h.b16 %v87
    %v526 = vunpack.c.l.b16 %v88
    %v527 = vunpack.c.h.b16 %v88
    %v528 = vunpack.c.l.b16 %v89
    %v529 = vunpack.c.h.b16 %v89
    %v530 = vunpack.c.l.b16 %v90
    %v531 = vunpack.c.h.b16 %v90
    %v532 = vunpack.c.l.b16 %v91
    %v533 = vunpack.c.h.b16 %v91
    %v534 = vunpack.c.l.b16 %v92
    %v535 = vunpack.c.h.b16 %v92
    %v536 = vunpack.c.l.b16 %v93
    %v537 = vunpack.c.h.b16 %v93
    %v538 = vunpack.c.l.b16 %v94
    %v539 = vunpack.c.h.b16 %v94
    %v540 = vunpack.c.l.b16 %v95
    %v541 = vunpack.c.h.b16 %v95
    %v542 = vunpack.c.l.b16 %v96
    %v543 = vunpack.c.h.b16 %v96
    %v544 = vunpack.c.l.b16 %v97
    %v545 = vunpack.c.h.b16 %v97
    %v546 = vunpack.c.l.b16 %v98
    %v547 = vunpack.c.h.b16 %v98
    %v548 = vunpack.c.l.b16 %v99
    %v549 = vunpack.c.h.b16 %v99
    %v550 = vunpack.c.l.b16 %v100
    %v551 = vunpack.c.h.b16 %v100
    %v552 = vunpack.c.l.b16 %v101
    %v553 = vunpack.c.h.b16 %v101
    %v554 = vunpack.c.l.b16 %v102
    %v555 = vunpack.c.h.b16 %v102
    %v556 = vunpack.c.l.b16 %v103
    %v557 = vunpack.c.h.b16 %v103
    %v558 = vunpack.c.l.b16 %v104
    %v559 = vunpack.c.h.b16 %v104
    %v560 = vunpack.c.l.b16 %v105
    %v561 = vunpack.c.h.b16 %v105
    %v562 = vunpack.c.l.b16 %v106
    %v563 = vunpack.c.h.b16 %v106
    %v564 = vunpack.c.l.b16 %v107
    %v565 = vunpack.c.h.b16 %v107
    %v566 = vunpack.c.l.b16 %v108
    %v567 = vunpack.c.h.b16 %v108
    %v568 = vunpack.c.l.b16 %v109
    %v569 = vunpack.c.h.b16 %v109
    %v570 = vunpack.c.l.b16 %v110
    %v571 = vunpack.c.h.b16 %v110
    %v572 = vunpack.c.l.b16 %v111
    %v573 = vunpack.c.h.b16 %v111
    %v574 = vunpack.c.l.b16 %v112
    %v575 = vunpack.c.h.b16 %v112
    %v576 = vunpack.c.l.b16 %v113
    %v577 = vunpack.c.h.b16 %v113
    %v578 = vunpack.c.l.b16 %v114
    %v579 = vunpack.c.h.b16 %v114
    %v580 = vunpack.c.l.b16 %v115
    %v581 = vunpack.c.h.b16 %v115
    %v582 = vunpack.c.l.b16 %v116
    %v583 = vunpack.c.h.b16 %v116
    %v584 = vunpack.c.l.b16 %v117
    %v585 = vunpack.c.h.b16 %v117
    %v586 = vunpack.c.l.b16 %v118
    %v587 = vunpack.c.h.b16 %v118
    %v588 = vunpack.c.l.b16 %v119
    %v589 = vunpack.c.h.b16 %v119
    %v590 = vunpack.c.l.b16 %v120
    %v591 = vunpack.c.h.b16 %v120
    %v592 = vunpack.c.l.b16 %v121
    %v593 = vunpack.c.h.b16 %v121
    %v594 = vunpack.c.l.b16 %v122
    %v595 = vunpack.c.h.b16 %v122
    %v596 = vunpack.c.l.b16 %v123
    %v597 = vunpack.c.h.b16 %v123
    %v598 = vunpack.c.l.b16 %v124
    %v599 = vunpack.c.h.b16 %v124
    %v600 = vunpack.c.l.b16 %v125
    %v601 = vunpack.c.h.b16 %v125
    %v602 = vunpack.c.l.b16 %v126
    %v603 = vunpack.c.h.b16 %v126
    %v604 = vunpack.c.l.b16 %v127
    %v605 = vunpack.c.h.b16 %v127
    %v606 = vunpack.c.l.b16 %v128
    %v607 = vunpack.c.h.b16 %v128
    %v608 = vunpack.c.l.b16 %v129
    %v609 = vunpack.c.h.b16 %v129
    %v610 = vunpack.c.l.b16 %v130
    %v611 = vunpack.c.h.b16 %v130
    %v612 = vunpack.c.l.b16 %v131
    %v613 = vunpack.c.h.b16 %v131
    %v614 = vunpack.c.l.b16 %v132
    %v615 = vunpack.c.h.b16 %v132
    %v616 = vunpack.c.l.b16 %v133
    %v617 = vunpack.c.h.b16 %v133
    %v618 = vunpack.c.l.b16 %v134
    %v619 = vunpack.c.h.b16 %v134
    %v620 = vunpack.c.l.b16 %v135
    %v621 = vunpack.c.h.b16 %v135
    %v622 = vunpack.c.l.b16 %v136
    %v623 = vunpack.c.h.b16 %v136
    %v624 = vunpack.c.l.b16 %v137
    %v625 = vunpack.c.h.b16 %v137
    %v626 = vunpack.c.l.b16 %v138
    %v627 = vunpack.c.h.b16 %v138
    %v628 = vunpack.c.l.b16 %v139
    %v629 = vunpack.c.h.b16 %v139
    %v630 = vunpack.c.l.b16 %v140
    %v631 = vunpack.c.h.b16 %v140
    %v632 = vunpack.c.l.b16 %v141
    %v633 = vunpack.c.h.b16 %v141
    %v634 = vunpack.c.l.b16 %v142
    %v635 = vunpack.c.h.b16 %v142
    %v636 = vunpack.c.l.b16 %v143
    %v637 = vunpack.c.h.b16 %v143
    %v638 = vunpack.c.l.b16 %v144
    %v639 = vunpack.c.h.b16 %v144
    %v640 = vunpack.c.l.b16 %v145
    %v641 = vunpack.c.h.b16 %v145
    %v642 = vunpack.c.l.b16 %v146
    %v643 = vunpack.c.h.b16 %v146
    %v644 = vunpack.c.l.b16 %v147
    %v645 = vunpack.c.h.b16 %v147
    %v646 = vunpack.c.l.b16 %v148
    %v647 = vunpack.c.h.b16 %v148
    %v648 = vunpack.c.l.b16 %v149
    %v649 = vunpack.c.h.b16 %v149
    %v650 = vunpack.c.l.b16 %v150
    %v651 = vunpack.c.h.b16 %v150
    %v652 = vunpack.c.l.b16 %v151
    %v653 = vunpack.c.h.b16 %v151
    %v654 = vunpack.c.l.b16 %v152
    %v655 = vunpack.c.h.b16 %v152
    %v656 = vunpack.c.l.b16 %v153
    %v657 = vunpack.c.h.b16 %v153
    %v658 = vunpack.c.l.b16 %v154
    %v659 = vunpack.c.h.b16 %v154
    %v660 = vunpack.c.l.b16 %v155
    %v661 = vunpack.c.h.b16 %v155
    %v662 = vunpack.c.l.b16 %v156
    %v663 = vunpack.c.h.b16 %v156
    %v664 = vunpack.c.l.b16 %v157
    %v665 = vunpack.c.h.b16 %v157
    %v666 = vunpack.c.l.b16 %v158
    %v667 = vunpack.c.h.b16 %v158
    %v668 = vunpack.c.l.b16 %v159
    %v669 = vunpack.c.h.b16 %v159
    %v670 = vunpack.c.l.b16 %v160
    %v671 = vunpack.c.h.b16 %v160
    %v672 = vunpack.c.l.b16 %v161
    %v673 = vunpack.c.h.b16 %v161
    %v674 = vunpack.c.l.b16 %v162
    %v675 = vunpack.c.h.b16 %v162
    %v676 = vunpack.c.l.b16 %v163
    %v677 = vunpack.c.h.b16 %v163
    %v678 = vunpack.c.l.b16 %v164
    %v679 = vunpack.c.h.b16 %v164
    %v680 = vunpack.c.l.b16 %v165
    %v681 = vunpack.c.h.b16 %v165
    %v682 = vunpack.c.l.b16 %v166
    %v683 = vunpack.c.h.b16 %v166
    %v684 = vunpack.c.l.b16 %v167
    %v685 = vunpack.c.h.b16 %v167
    %v686 = vunpack.c.l.b16 %v168
    %v687 = vunpack.c.h.b16 %v168
    %v688 = vunpack.c.l.b16 %v169
    %v689 = vunpack.c.h.b16 %v169
    %v690 = vunpack.c.l.b16 %v170
    %v691 = vunpack.c.h.b16 %v170
    %v692 = vunpack.c.l.b16 %v171
    %v693 = vunpack.c.h.b16 %v171
    %v694 = vunpack.c.l.b16 %v172
    %v695 = vunpack.c.h.b16 %v172
    %v696 = vunpack.c.l.b16 %v173
    %v697 = vunpack.c.h.b16 %v173
    %v698 = vunpack.c.l.b16 %v174
    %v699 = vunpack.c.h.b16 %v174
    %v700 = vunpack.c.l.b16 %v175
    %v701 = vunpack.c.h.b16 %v175
    %v702 = vunpack.c.l.b16 %v176
    %v703 = vunpack.c.h.b16 %v176
    %v704 = vunpack.c.l.b16 %v177
    %v705 = vunpack.c.h.b16 %v177
    %v706 = vunpack.c.l.b16 %v178
    %v707 = vunpack.c.h.b16 %v178
    %v708 = vunpack.c.l.b16 %v179
    %v709 = vunpack.c.h.b16 %v179
    %v710 = vunpack.c.l.b16 %v180
    %v711 = vunpack.c.h.b16 %v180
    %v712 = vunpack.c.l.b16 %v181
    %v713 = vunpack.c.h.b16 %v181
    %v714 = vunpack.c.l.b16 %v182
    %v715 = vunpack.c.h.b16 %v182
    %v716 = vunpack.c.l.b16 %v183
    %v717 = vunpack.c.h.b16 %v183
    %v718 = vunpack.c.l.b16 %v184
    %v719 = vunpack.c.h.b16 %v184
    %v720 = vunpack.c.l.b16 %v185
    %v721 = vunpack.c.h.b16 %v185
    %v722 = vunpack.c.l.b16 %v186
    %v723 = vunpack.c.h.b16 %v186
    %v724 = vunpack.c.l.b16 %v187
    %v725 = vunpack.c.h.b16 %v187
    %v726 = vunpack.c.l.b16 %v188
    %v727 = vunpack.c.h.b16 %v188
    %v728 = vunpack.c.l.b16 %v189
    %v729 = vunpack.c.h.b16 %v189
    %v730 = vunpack.c.l.b16 %v190
    %v731 = vunpack.c.h.b16 %v190
    %v732 = vunpack.c.l.b16 %v191
    %v733 = vunpack.c.h.b16 %v191
    %v734 = vunpack.c.l.b16 %v192
    %v735 = vunpack.c.h.b16 %v192
    %v736 = vunpack.c.l.b16 %v193
    %v737 = vunpack.c.h.b16 %v193
    %v738 = vunpack.c.l.b16 %v194
    %v739 = vunpack.c.h.b16 %v194
    %v740 = vunpack.c.l.b16 %v195
    %v741 = vunpack.c.h.b16 %v195
    %v742 = vunpack.c.l.b16 %v196
    %v743 = vunpack.c.h.b16 %v196
    %v744 = vunpack.c.l.b16 %v197
    %v745 = vunpack.c.h.b16 %v197
    %v746 = vunpack.c.l.b16 %v198
    %v747 = vunpack.c.h.b16 %v198
    %v748 = vunpack.c.l.b16 %v199
    %v749 = vunpack.c.h.b16 %v199
    %v750 = vunpack.c.l.b16 %v200
    %v751 = vunpack.c.h.b16 %v200
    %v752 = vunpack.c.l.b16 %v201
    %v753 = vunpack.c.h.b16 %v201
    %v754 = vunpack.c.l.b16 %v202
    %v755 = vunpack.c.h.b16 %v202
    %v756 = vunpack.c.l.b16 %v203
    %v757 = vunpack.c.h.b16 %v203
    %v758 = vunpack.c.l.b16 %v204
    %v759 = vunpack.c.h.b16 %v204
    %v760 = vunpack.c.l.b16 %v205
    %v761 = vunpack.c.h.b16 %v205
    %v762 = vunpack.c.l.b16 %v206
    %v763 = vunpack.c.h.b16 %v206
    %v764 = vunpack.c.l.b16 %v207
    %v765 = vunpack.c.h.b16 %v207
    %v766 = vunpack.c.l.b16 %v208
    %v767 = vunpack.c.h.b16 %v208
    %v768 = vunpack.c.l.b16 %v209
    %v769 = vunpack.c.h.b16 %v209
    %v770 = vunpack.c.l.b16 %v210
    %v771 = vunpack.c.h.b16 %v210
    %v772 = vunpack.c.l.b16 %v211
    %v773 = vunpack.c.h.b16 %v211
    %v774 = vunpack.c.l.b16 %v212
    %v775 = vunpack.c.h.b16 %v212
    %v776 = vunpack.c.l.b16 %v213
    %v777 = vunpack.c.h.b16 %v213
    %v778 = vunpack.c.l.b16 %v214
    %v779 = vunpack.c.h.b16 %v214
    %v780 = vunpack.c.l.b16 %v215
    %v781 = vunpack.c.h.b16 %v215
    %v782 = vunpack.c.l.b16 %v216
    %v783 = vunpack.c.h.b16 %v216
    %v784 = vunpack.c.l.b16 %v217
    %v785 = vunpack.c.h.b16 %v217
    %v786 = vunpack.c.l.b16 %v218
    %v787 = vunpack.c.h.b16 %v218
    %v788 = vunpack.c.l.b16 %v219
    %v789 = vunpack.c.h.b16 %v219
    %v790 = vunpack.c.l.b16 %v220
    %v791 = vunpack.c.h.b16 %v220
    %v792 = vunpack.c.l.b16 %v221
    %v793 = vunpack.c.h.b16 %v221
    %v794 = vunpack.c.l.b16 %v222
    %v795 = vunpack.c.h.b16 %v222
    %v796 = vunpack.c.l.b16 %v223
    %v797 = vunpack.c.h.b16 %v223
    %v798 = vunpack.c.l.b16 %v224
    %v799 = vunpack.c.h.b16 %v224
    %v800 = vunpack.c.l.b16 %v225
    %v801 = vunpack.c.h.b16 %v225
    %v802 = vunpack.c.l.b16 %v226
    %v803 = vunpack.c.h.b16 %v226
    %v804 = vunpack.c.l.b16 %v227
    %v805 = vunpack.c.h.b16 %v227
    %v806 = vunpack.c.l.b16 %v228
    %v807 = vunpack.c.h.b16 %v228
    %v808 = vunpack.c.l.b16 %v229
    %v809 = vunpack.c.h.b16 %v229
    %v810 = vunpack.c.l.b16 %v230
    %v811 = vunpack.c.h.b16 %v230
    %v812 = vunpack.c.l.b16 %v231
    %v813 = vunpack.c.h.b16 %v231
    %v814 = vunpack.c.l.b16 %v232
    %v815 = vunpack.c.h.b16 %v232
    %v816 = vunpack.c.l.b16 %v233
    %v817 = vunpack.c.h.b16 %v233
    %v818 = vunpack.c.l.b16 %v234
    %v819 = vunpack.c.h.b16 %v234
    %v820 = vunpack.c.l.b16 %v235
    %v821 = vunpack.c.h.b16 %v235
    %v822 = vunpack.c.l.b16 %v236
    %v823 = vunpack.c.h.b16 %v236
    %v824 = vunpack.c.l.b16 %v237
    %v825 = vunpack.c.h.b16 %v237
    %v826 = vunpack.c.l.b16 %v238
    %v827 = vunpack.c.h.b16 %v238
    %v828 = vunpack.c.l.b16 %v239
    %v829 = vunpack.c.h.b16 %v239
    %v830 = vunpack.c.l.b16 %v240
    %v831 = vunpack.c.h.b16 %v240
    %v832 = vunpack.c.l.b16 %v241
    %v833 = vunpack.c.h.b16 %v241
    %v834 = vunpack.c.l.b16 %v242
    %v835 = vunpack.c.h.b16 %v242
    %v836 = vunpack.c.l.b16 %v243
    %v837 = vunpack.c.h.b16 %v243
    %v838 = vunpack.c.l.b16 %v244
    %v839 = vunpack.c.h.b16 %v244
    %v840 = vunpack.c.l.b16 %v245
    %v841 = vunpack.c.h.b16 %v245
    %v842 = vunpack.c.l.b16 %v246
    %v843 = vunpack.c.h.b16 %v246
    %v844 = vunpack.c.l.b16 %v247
    %v845 = vunpack.c.h.b16 %v247
    %v846 = vunpack.c.l.b16 %v248
    %v847 = vunpack.c.h.b16 %v248
    %v848 = vunpack.c.l.b16 %v249
    %v849 = vunpack.c.h.b16 %v249
    %v850 = vunpack.c.l.b16 %v250
    %v851 = vunpack.c.h.b16 %v250
    %v852 = vunpack.c.l.b16 %v251
    %v853 = vunpack.c.h.b16 %v251
    %v854 = vunpack.c.l.b16 %v252
    %v855 = vunpack.c.h.b16 %v252
    %v856 = vunpack.c.l.b16 %v253
    %v857 = vunpack.c.h.b16 %v253
    %v858 = vunpack.c.l.b16 %v254
    %v859 = vunpack.c.h.b16 %v254
    %v860 = vunpack.c.l.b16 %v255
    %v861 = vunpack.c.h.b16 %v255
    %v862 = vunpack.c.l.b16 %v256
    %v863 = vunpack.c.h.b16 %v256
    %v864 = vunpack.c.l.b16 %v257
    %v865 = vunpack.c.h.b16 %v257
    %v866 = vunpack.c.l.b16 %v258
    %v867 = vunpack.c.h.b16 %v258
    %v868 = vunpack.c.l.b16 %v259
    %v869 = vunpack.c.h.b16 %v259
    %v870 = vunpack.c.l.b16 %v260
    %v871 = vunpack.c.h.b16 %v260
    %v872 = vunpack.c.l.b16 %v261
    %v873 = vunpack.c.h.b16 %v261
    %v874 = vunpack.c.l.b16 %v262
    %v875 = vunpack.c.h.b16 %v262
    %v876 = vunpack.c.l.b16 %v263
    %v877 = vunpack.c.h.b16 %v263
    %v878 = vunpack.c.l.b16 %v264
    %v879 = vunpack.c.h.b16 %v264
    %v880 = vunpack.c.l.b16 %v265
    %v881 = vunpack.c.h.b16 %v265
    %v882 = vunpack.c.l.b16 %v266
    %v883 = vunpack.c.h.b16 %v266
    %v884 = vunpack.c.l.b16 %v267
    %v885 = vunpack.c.h.b16 %v267
    %v886 = vpack.c.b16 %v510, %v502
    %v887 = vpack.c.b16 %v511, %v503
    %v888 = vpack.c.b16 %v512, %v504
    %v889 = vpack.c.b16 %v513, %v505
    %v890 = vpack.c.b16 %v514, %v506
    %v891 = vpack.c.b16 %v515, %v507
    %v892 = vpack.c.b16 %v516, %v508
    %v893 = vpack.c.b16 %v517, %v509
    %v894 = vpack.c.b16 %v526, %v518
    %v895 = vpack.c.b16 %v527, %v519
    %v896 = vpack.c.b16 %v528, %v520
    %v897 = vpack.c.b16 %v529, %v521
    %v898 = vpack.c.b16 %v530, %v522
    %v899 = vpack.c.b16 %v531, %v523
    %v900 = vpack.c.b16 %v532, %v524
    %v901 = vpack.c.b16 %v533, %v525
    %v902 = vpack.c.b16 %v542, %v534
    %v903 = vpack.c.b16 %v543, %v535
    %v904 = vpack.c.b16 %v544, %v536
    %v905 = vpack.c.b16 %v545, %v537
    %v906 = vpack.c.b16 %v546, %v538
    %v907 = vpack.c.b16 %v547, %v539
    %v908 = vpack.c.b16 %v548, %v540
    %v909 = vpack.c.b16 %v549, %v541
    %v910 = vpack.c.b16 %v558, %v550
    %v911 = vpack.c.b16 %v559, %v551
    %v912 = vpack.c.b16 %v560, %v552
    %v913 = vpack.c.b16 %v561, %v553
    %v914 = vpack.c.b16 %v562, %v554
    %v915 = vpack.c.b16 %v563, %v555
    %v916 = vpack.c.b16 %v564, %v556
    %v917 = vpack.c.b16 %v565, %v557
    %v918 = vpack.c.b16 %v574, %v566
    %v919 = vpack.c.b16 %v575, %v567
    %v920 = vpack.c.b16 %v576, %v568
    %v921 = vpack.c.b16 %v577, %v569
    %v922 = vpack.c.b16 %v578, %v570
    %v923 = vpack.c.b16 %v579, %v571
    %v924 = vpack.c.b16 %v580, %v572
    %v925 = vpack.c.b16 %v581, %v573
    %v926 = vpack.c.b16 %v590, %v582
    %v927 = vpack.c.b16 %v591, %v583
    %v928 = vpack.c.b16 %v592, %v584
    %v929 = vpack.c.b16 %v593, %v585
    %v930 = vpack.c.b16 %v594, %v586
    %v931 = vpack.c.b16 %v595, %v587
    %v932 = vpack.c.b16 %v596, %v588
    %v933 = vpack.c.b16 %v597, %v589
    %v934 = vpack.c.b16 %v606, %v598
    %v935 = vpack.c.b16 %v607, %v599
    %v936 = vpack.c.b16 %v608, %v600
    %v937 = vpack.c.b16 %v609, %v601
    %v938 = vpack.c.b16 %v610, %v602
    %v939 = vpack.c.b16 %v611, %v603
    %v940 = vpack.c.b16 %v612, %v604
    %v941 = vpack.c.b16 %v613, %v605
    %v942 = vpack.c.b16 %v622, %v614
    %v943 = vpack.c.b16 %v623, %v615
    %v944 = vpack.c.b16 %v624, %v616
    %v945 = vpack.c.b16 %v625, %v617
    %v946 = vpack.c.b16 %v626, %v618
    %v947 = vpack.c.b16 %v627, %v619
    %v948 = vpack.c.b16 %v628, %v620
    %v949 = vpack.c.b16 %v629, %v621
    %v950 = vpack.c.b16 %v638, %v630
    %v951 = vpack.c.b16 %v639, %v631
    %v952 = vpack.c.b16 %v640, %v632
    %v953 = vpack.c.b16 %v641, %v633
    %v954 = vpack.c.b16 %v642, %v634
    %v955 = vpack.c.b16 %v643, %v635
    %v956 = vpack.c.b16 %v644, %v636
    %v957 = vpack.c.b16 %v645, %v637
    %v958 = vpack.c.b16 %v654, %v646
    %v959 = vpack.c.b16 %v655, %v647
    %v960 = vpack.c.b16 %v656, %v648
    %v961 = vpack.c.b16 %v657, %v649
    %v962 = vpack.c.b16 %v658, %v650
    %v963 = vpack.c.b16 %v659, %v651
    %v964 = vpack.c.b16 %v660, %v652
    %v965 = vpack.c.b16 %v661, %v653
    %v966 = vpack.c.b16 %v670, %v662
    %v967 = vpack.c.b16 %v671, %v663
    %v968 = vpack.c.b16 %v672, %v664
    %v969 = vpack.c.b16 %v673, %v665
    %v970 = vpack.c.b16 %v674, %v666
    %v971 = vpack.c.b16 %v675, %v667
    %v972 = vpack.c.b16 %v676, %v668
    %v973 = vpack.c.b16 %v677, %v669
    %v974 = vpack.c.b16 %v686, %v678
    %v975 = vpack.c.b16 %v687, %v679
    %v976 = vpack.c.b16 %v688, %v680
    %v977 = vpack.c.b16 %v689, %v681
    %v978 = vpack.c.b16 %v690, %v682
    %v979 = vpack.c.b16 %v691, %v683
    %v980 = vpack.c.b16 %v692, %v684
    %v981 = vpack.c.b16 %v693, %v685
    %v982 = vpack.c.b16 %v702, %v694
    %v983 = vpack.c.b16 %v703, %v695
    %v984 = vpack.c.b16 %v704, %v696
    %v985 = vpack.c.b16 %v705, %v697
    %v986 = vpack.c.b16 %v706, %v698
    %v987 = vpack.c.b16 %v707, %v699
    %v988 = vpack.c.b16 %v708, %v700
    %v989 = vpack.c.b16 %v709, %v701
    %v990 = vpack.c.b16 %v718, %v710
    %v991 = vpack.c.b16 %v719, %v711
    %v992 = vpack.c.b16 %v720, %v712
    %v993 = vpack.c.b16 %v721, %v713
    %v994 = vpack.c.b16 %v722, %v714
    %v995 = vpack.c.b16 %v723, %v715
    %v996 = vpack.c.b16 %v724, %v716
    %v997 = vpack.c.b16 %v725, %v717
    %v998 = vpack.c.b16 %v734, %v726
    %v999 = vpack.c.b16 %v735, %v727
    %v1000 = vpack.c.b16 %v736, %v728
    %v1001 = vpack.c.b16 %v737, %v729
    %v1002 = vpack.c.b16 %v738, %v730
    %v1003 = vpack.c.b16 %v739, %v731
    %v1004 = vpack.c.b16 %v740, %v732
    %v1005 = vpack.c.b16 %v741, %v733
    %v1006 = vpack.c.b16 %v750, %v742
    %v1007 = vpack.c.b16 %v751, %v743
    %v1008 = vpack.c.b16 %v752, %v744
    %v1009 = vpack.c.b16 %v753, %v745
    %v1010 = vpack.c.b16 %v754, %v746
    %v1011 = vpack.c.b16 %v755, %v747
    %v1012 = vpack.c.b16 %v756, %v748
    %v1013 = vpack.c.b16 %v757, %v749
    %v1014 = vpack.c.b16 %v766, %v758
    %v1015 = vpack.c.b16 %v767, %v759
    %v1016 = vpack.c.b16 %v768, %v760
    %v1017 = vpack.c.b16 %v769, %v761
    %v1018 = vpack.c.b16 %v770, %v762
    %v1019 = vpack.c.b16 %v771, %v763
    %v1020 = vpack.c.b16 %v772, %v764
    %v1021 = vpack.c.b16 %v773, %v765
    %v1022 = vpack.c.b16 %v782, %v774
    %v1023 = vpack.c.b16 %v783, %v775
    %v1024 = vpack.c.b16 %v784, %v776
    %v1025 = vpack.c.b16 %v785, %v777
    %v1026 = vpack.c.b16 %v786, %v778
    %v1027 = vpack.c.b16 %v787, %v779
    %v1028 = vpack.c.b16 %v788, %v780
    %v1029 = vpack.c.b16 %v789, %v781
    %v1030 = vpack.c.b16 %v798, %v790
    %v1031 = vpack.c.b16 %v799, %v791
    %v1032 = vpack.c.b16 %v800, %v792
    %v1033 = vpack.c.b16 %v801, %v793
    %v1034 = vpack.c.b16 %v802, %v794
    %v1035 = vpack.c.b16 %v803, %v795
    %v1036 = vpack.c.b16 %v804, %v796
    %v1037 = vpack.c.b16 %v805, %v797
    %v1038 = vpack.c.b16 %v814, %v806
    %v1039 = vpack.c.b16 %v815, %v807
    %v1040 = vpack.c.b16 %v816, %v808
    %v1041 = vpack.c.b16 %v817, %v809
    %v1042 = vpack.c.b16 %v818, %v810
    %v1043 = vpack.c.b16 %v819, %v811
    %v1044 = vpack.c.b16 %v820, %v812
    %v1045 = vpack.c.b16 %v821, %v813
    %v1046 = vpack.c.b16 %v830, %v822
    %v1047 = vpack.c.b16 %v831, %v823
    %v1048 = vpack.c.b16 %v832, %v824
    %v1049 = vpack.c.b16 %v833, %v825
    %v1050 = vpack.c.b16 %v834, %v826
    %v1051 = vpack.c.b16 %v835, %v827
    %v1052 = vpack.c.b16 %v836, %v828
    %v1053 = vpack.c.b16 %v837, %v829
    %v1054 = vpack.c.b16 %v846, %v838
    %v1055 = vpack.c.b16 %v847, %v839
    %v1056 = vpack.c.b16 %v848, %v840
    %v1057 = vpack.c.b16 %v849, %v841
    %v1058 = vpack.c.b16 %v850, %v842
    %v1059 = vpack.c.b16 %v851, %v843
    %v1060 = vpack.c.b16 %v852, %v844
    %v1061 = vpack.c.b16 %v853, %v845
    %v1062 = vpack.c.b16 %v862, %v854
    %v1063 = vpack.c.b16 %v863, %v855
    %v1064 = vpack.c.b16 %v864, %v856
    %v1065 = vpack.c.b16 %v865, %v857
    %v1066 = vpack.c.b16 %v866, %v858
    %v1067 = vpack.c.b16 %v867, %v859
    %v1068 = vpack.c.b16 %v868, %v860
    %v1069 = vpack.c.b16 %v869, %v861
    %v1070 = vpack.c.b16 %v878, %v870
    %v1071 = vpack.c.b16 %v879, %v871
    %v1072 = vpack.c.b16 %v880, %v872
    %v1073 = vpack.c.b16 %v881, %v873
    %v1074 = vpack.c.b16 %v882, %v874
    %v1075 = vpack.c.b16 %v883, %v875
    %v1076 = vpack.c.b16 %v884, %v876
    %v1077 = vpack.c.b16 %v885, %v877
    %1270 = vmatprep.subr.bf16.mxu0 %v943
    %1271 = vmatpush1.bf16.msra.mxu0 %v942
    %1272 = vmatprep.subr.bf16.mxu0 %v935
    %1273 = vmatpush1.bf16.msra.mxu0 %v934
    %1274 = vmatprep.subr.bf16.mxu0 %v927
    %1275 = vmatpush1.bf16.msra.mxu0 %v926
    %1276 = vmatprep.subr.bf16.mxu0 %v919
    %1277 = vmatpush1.bf16.msra.mxu0 %v918
    %1278 = vmatprep.subr.bf16.mxu0 %v911
    %1279 = vmatpush1.bf16.msra.mxu0 %v910
    %1280 = vmatprep.subr.bf16.mxu0 %v903
    %1281 = vmatpush1.bf16.msra.mxu0 %v902
    %1282 = vmatprep.subr.bf16.mxu0 %v895
    %1283 = vmatpush1.bf16.msra.mxu0 %v894
    %1284 = vmatprep.subr.bf16.mxu0 %v887
    %1285 = vmatpush1.bf16.msra.mxu0 %v886
    %1286 = vmatprep.subr.bf16.mxu0 %v1007
    %1287 = vmatpush2.bf16.msra.mxu0 %v1006
    %1288 = vmatprep.subr.bf16.mxu0 %v999
    %1289 = vmatpush2.bf16.msra.mxu0 %v998
    %1290 = vmatprep.subr.bf16.mxu0 %v991
    %1291 = vmatpush2.bf16.msra.mxu0 %v990
    %1292 = vmatprep.subr.bf16.mxu0 %v983
    %1293 = vmatpush2.bf16.msra.mxu0 %v982
    %1294 = vmatprep.subr.bf16.mxu0 %v975
    %1295 = vmatpush2.bf16.msra.mxu0 %v974
    %1296 = vmatprep.subr.bf16.mxu0 %v967
    %1297 = vmatpush2.bf16.msra.mxu0 %v966
    %1298 = vmatprep.subr.bf16.mxu0 %v959
    %1299 = vmatpush2.bf16.msra.mxu0 %v958
    %1300 = vmatprep.subr.bf16.mxu0 %v951
    %1301 = vmatpush2.bf16.msra.mxu0 %v950
    %1302 = vmatprep.mubr.bf16.mxu0 %v72
    %1303 = vmatmul.mubr.bf16.gmra.mxu0 %v69
    %v1304 = vpop.f32.mrf.mxu0
    %v1305 = vadd.f32 %v273, %v1304
    %v1306 = vpop.f32.mrf.mxu0
    %v1307 = vadd.f32 %v277, %v1306
    %v1308 = vpop.f32.mrf.mxu0
    %v1309 = vpop.f32.mrf.mxu0
    %1310 = vdwg.mxu0
    %1311 = vmatprep.subr.bf16.mxu0 %v1071
    %1312 = vmatpush1.bf16.msra.mxu0 %v1070
    %1313 = vmatprep.subr.bf16.mxu0 %v1063
    %1314 = vmatpush1.bf16.msra.mxu0 %v1062
    %1315 = vmatprep.subr.bf16.mxu0 %v1055
    %1316 = vmatpush1.bf16.msra.mxu0 %v1054
    %1317 = vmatprep.subr.bf16.mxu0 %v1047
    %1318 = vmatpush1.bf16.msra.mxu0 %v1046
    %1319 = vmatprep.subr.bf16.mxu0 %v1039
    %1320 = vmatpush1.bf16.msra.mxu0 %v1038
    %1321 = vmatprep.subr.bf16.mxu0 %v1031
    %1322 = vmatpush1.bf16.msra.mxu0 %v1030
    %1323 = vmatprep.subr.bf16.mxu0 %v1023
    %1324 = vmatpush1.bf16.msra.mxu0 %v1022
    %1325 = vmatprep.subr.bf16.mxu0 %v1015
    %1326 = vmatpush1.bf16.msra.mxu0 %v1014
    %1327 = vmatprep.subr.bf16.mxu0 0
    %1328 = vmatpush2.bf16.msra.mxu0 0
    %1329 = vmatprep.subr.bf16.mxu0 0
    %1330 = vmatpush2.bf16.msra.mxu0 0
    %1331 = vmatprep.subr.bf16.mxu0 0
    %1332 = vmatpush2.bf16.msra.mxu0 0
    %1333 = vmatprep.subr.bf16.mxu0 0
    %1334 = vmatpush2.bf16.msra.mxu0 0
    %1335 = vmatprep.subr.bf16.mxu0 0
    %1336 = vmatpush2.bf16.msra.mxu0 0
    %1337 = vmatprep.subr.bf16.mxu0 0
    %1338 = vmatpush2.bf16.msra.mxu0 0
    %1339 = vmatprep.subr.bf16.mxu0 0
    %1340 = vmatpush2.bf16.msra.mxu0 0
    %1341 = vmatprep.subr.bf16.mxu0 0
    %1342 = vmatpush2.bf16.msra.mxu0 0
    %1343 = vmatprep.mubr.bf16.mxu0 0
    %1344 = vmatmul.mubr.bf16.gmra.mxu0 %v75
    %v1345 = vpop.f32.mrf.mxu0
    %v1346 = vadd.f32 %v1305, %v1345
    %v1347 = vpop.f32.mrf.mxu0
    %v1348 = vadd.f32 %v1307, %v1347
    %v1349 = vpop.f32.mrf.mxu0
    %v1350 = vpop.f32.mrf.mxu0
    %1351 = vdwg.mxu0
    %1352 = vmatprep.subr.bf16.mxu0 %v945
    %1353 = vmatpush1.bf16.msra.mxu0 %v944
    %1354 = vmatprep.subr.bf16.mxu0 %v937
    %1355 = vmatpush1.bf16.msra.mxu0 %v936
    %1356 = vmatprep.subr.bf16.mxu0 %v929
    %1357 = vmatpush1.bf16.msra.mxu0 %v928
    %1358 = vmatprep.subr.bf16.mxu0 %v921
    %1359 = vmatpush1.bf16.msra.mxu0 %v920
    %1360 = vmatprep.subr.bf16.mxu0 %v913
    %1361 = vmatpush1.bf16.msra.mxu0 %v912
    %1362 = vmatprep.subr.bf16.mxu0 %v905
    %1363 = vmatpush1.bf16.msra.mxu0 %v904
    %1364 = vmatprep.subr.bf16.mxu0 %v897
    %1365 = vmatpush1.bf16.msra.mxu0 %v896
    %1366 = vmatprep.subr.bf16.mxu0 %v889
    %1367 = vmatpush1.bf16.msra.mxu0 %v888
    %1368 = vmatprep.subr.bf16.mxu0 %v1009
    %1369 = vmatpush2.bf16.msra.mxu0 %v1008
    %1370 = vmatprep.subr.bf16.mxu0 %v1001
    %1371 = vmatpush2.bf16.msra.mxu0 %v1000
    %1372 = vmatprep.subr.bf16.mxu0 %v993
    %1373 = vmatpush2.bf16.msra.mxu0 %v992
    %1374 = vmatprep.subr.bf16.mxu0 %v985
    %1375 = vmatpush2.bf16.msra.mxu0 %v984
    %1376 = vmatprep.subr.bf16.mxu0 %v977
    %1377 = vmatpush2.bf16.msra.mxu0 %v976
    %1378 = vmatprep.subr.bf16.mxu0 %v969
    %1379 = vmatpush2.bf16.msra.mxu0 %v968
    %1380 = vmatprep.subr.bf16.mxu0 %v961
    %1381 = vmatpush2.bf16.msra.mxu0 %v960
    %1382 = vmatprep.subr.bf16.mxu0 %v953
    %1383 = vmatpush2.bf16.msra.mxu0 %v952
    %1384 = vmatprep.mubr.bf16.mxu0 %v72
    %1385 = vmatmul.mubr.bf16.gmra.mxu0 %v69
    %v1386 = vpop.f32.mrf.mxu0
    %v1387 = vadd.f32 %v281, %v1386
    %v1388 = vpop.f32.mrf.mxu0
    %v1389 = vadd.f32 %v285, %v1388
    %v1390 = vpop.f32.mrf.mxu0
    %v1391 = vpop.f32.mrf.mxu0
    %1392 = vdwg.mxu0
    %1393 = vmatprep.subr.bf16.mxu0 %v1073
    %1394 = vmatpush1.bf16.msra.mxu0 %v1072
    %1395 = vmatprep.subr.bf16.mxu0 %v1065
    %1396 = vmatpush1.bf16.msra.mxu0 %v1064
    %1397 = vmatprep.subr.bf16.mxu0 %v1057
    %1398 = vmatpush1.bf16.msra.mxu0 %v1056
    %1399 = vmatprep.subr.bf16.mxu0 %v1049
    %1400 = vmatpush1.bf16.msra.mxu0 %v1048
    %1401 = vmatprep.subr.bf16.mxu0 %v1041
    %1402 = vmatpush1.bf16.msra.mxu0 %v1040
    %1403 = vmatprep.subr.bf16.mxu0 %v1033
    %1404 = vmatpush1.bf16.msra.mxu0 %v1032
    %1405 = vmatprep.subr.bf16.mxu0 %v1025
    %1406 = vmatpush1.bf16.msra.mxu0 %v1024
    %1407 = vmatprep.subr.bf16.mxu0 %v1017
    %1408 = vmatpush1.bf16.msra.mxu0 %v1016
    %1409 = vmatprep.subr.bf16.mxu0 0
    %1410 = vmatpush2.bf16.msra.mxu0 0
    %1411 = vmatprep.subr.bf16.mxu0 0
    %1412 = vmatpush2.bf16.msra.mxu0 0
    %1413 = vmatprep.subr.bf16.mxu0 0
    %1414 = vmatpush2.bf16.msra.mxu0 0
    %1415 = vmatprep.subr.bf16.mxu0 0
    %1416 = vmatpush2.bf16.msra.mxu0 0
    %1417 = vmatprep.subr.bf16.mxu0 0
    %1418 = vmatpush2.bf16.msra.mxu0 0
    %1419 = vmatprep.subr.bf16.mxu0 0
    %1420 = vmatpush2.bf16.msra.mxu0 0
    %1421 = vmatprep.subr.bf16.mxu0 0
    %1422 = vmatpush2.bf16.msra.mxu0 0
    %1423 = vmatprep.subr.bf16.mxu0 0
    %1424 = vmatpush2.bf16.msra.mxu0 0
    %1425 = vmatprep.mubr.bf16.mxu0 0
    %1426 = vmatmul.mubr.bf16.gmra.mxu0 %v75
    %v1427 = vpop.f32.mrf.mxu0
    %v1428 = vadd.f32 %v1387, %v1427
    %v1429 = vpop.f32.mrf.mxu0
    %v1430 = vadd.f32 %v1389, %v1429
    %v1431 = vpop.f32.mrf.mxu0
    %v1432 = vpop.f32.mrf.mxu0
    %1433 = vdwg.mxu0
    %1434 = vmatprep.subr.bf16.mxu0 %v947
    %1435 = vmatpush1.bf16.msra.mxu0 %v946
    %1436 = vmatprep.subr.bf16.mxu0 %v939
    %1437 = vmatpush1.bf16.msra.mxu0 %v938
    %1438 = vmatprep.subr.bf16.mxu0 %v931
    %1439 = vmatpush1.bf16.msra.mxu0 %v930
    %1440 = vmatprep.subr.bf16.mxu0 %v923
    %1441 = vmatpush1.bf16.msra.mxu0 %v922
    %1442 = vmatprep.subr.bf16.mxu0 %v915
    %1443 = vmatpush1.bf16.msra.mxu0 %v914
    %1444 = vmatprep.subr.bf16.mxu0 %v907
    %1445 = vmatpush1.bf16.msra.mxu0 %v906
    %1446 = vmatprep.subr.bf16.mxu0 %v899
    %1447 = vmatpush1.bf16.msra.mxu0 %v898
    %1448 = vmatprep.subr.bf16.mxu0 %v891
    %1449 = vmatpush1.bf16.msra.mxu0 %v890
    %1450 = vmatprep.subr.bf16.mxu0 %v1011
    %1451 = vmatpush2.bf16.msra.mxu0 %v1010
    %1452 = vmatprep.subr.bf16.mxu0 %v1003
    %1453 = vmatpush2.bf16.msra.mxu0 %v1002
    %1454 = vmatprep.subr.bf16.mxu0 %v995
    %1455 = vmatpush2.bf16.msra.mxu0 %v994
    %1456 = vmatprep.subr.bf16.mxu0 %v987
    %1457 = vmatpush2.bf16.msra.mxu0 %v986
    %1458 = vmatprep.subr.bf16.mxu0 %v979
    %1459 = vmatpush2.bf16.msra.mxu0 %v978
    %1460 = vmatprep.subr.bf16.mxu0 %v971
    %1461 = vmatpush2.bf16.msra.mxu0 %v970
    %1462 = vmatprep.subr.bf16.mxu0 %v963
    %1463 = vmatpush2.bf16.msra.mxu0 %v962
    %1464 = vmatprep.subr.bf16.mxu0 %v955
    %1465 = vmatpush2.bf16.msra.mxu0 %v954
    %1466 = vmatprep.mubr.bf16.mxu0 %v72
    %1467 = vmatmul.mubr.bf16.gmra.mxu0 %v69
    %v1468 = vpop.f32.mrf.mxu0
    %v1469 = vadd.f32 %v289, %v1468
    %v1470 = vpop.f32.mrf.mxu0
    %v1471 = vadd.f32 %v293, %v1470
    %v1472 = vpop.f32.mrf.mxu0
    %v1473 = vpop.f32.mrf.mxu0
    %1474 = vdwg.mxu0
    %1475 = vmatprep.subr.bf16.mxu0 %v1075
    %1476 = vmatpush1.bf16.msra.mxu0 %v1074
    %1477 = vmatprep.subr.bf16.mxu0 %v1067
    %1478 = vmatpush1.bf16.msra.mxu0 %v1066
    %1479 = vmatprep.subr.bf16.mxu0 %v1059
    %1480 = vmatpush1.bf16.msra.mxu0 %v1058
    %1481 = vmatprep.subr.bf16.mxu0 %v1051
    %1482 = vmatpush1.bf16.msra.mxu0 %v1050
    %1483 = vmatprep.subr.bf16.mxu0 %v1043
    %1484 = vmatpush1.bf16.msra.mxu0 %v1042
    %1485 = vmatprep.subr.bf16.mxu0 %v1035
    %1486 = vmatpush1.bf16.msra.mxu0 %v1034
    %1487 = vmatprep.subr.bf16.mxu0 %v1027
    %1488 = vmatpush1.bf16.msra.mxu0 %v1026
    %1489 = vmatprep.subr.bf16.mxu0 %v1019
    %1490 = vmatpush1.bf16.msra.mxu0 %v1018
    %1491 = vmatprep.subr.bf16.mxu0 0
    %1492 = vmatpush2.bf16.msra.mxu0 0
    %1493 = vmatprep.subr.bf16.mxu0 0
    %1494 = vmatpush2.bf16.msra.mxu0 0
    %1495 = vmatprep.subr.bf16.mxu0 0
    %1496 = vmatpush2.bf16.msra.mxu0 0
    %1497 = vmatprep.subr.bf16.mxu0 0
    %1498 = vmatpush2.bf16.msra.mxu0 0
    %1499 = vmatprep.subr.bf16.mxu0 0
    %1500 = vmatpush2.bf16.msra.mxu0 0
    %1501 = vmatprep.subr.bf16.mxu0 0
    %1502 = vmatpush2.bf16.msra.mxu0 0
    %1503 = vmatprep.subr.bf16.mxu0 0
    %1504 = vmatpush2.bf16.msra.mxu0 0
    %1505 = vmatprep.subr.bf16.mxu0 0
    %1506 = vmatpush2.bf16.msra.mxu0 0
    %1507 = vmatprep.mubr.bf16.mxu0 0
    %1508 = vmatmul.mubr.bf16.gmra.mxu0 %v75
    %v1509 = vpop.f32.mrf.mxu0
    %v1510 = vadd.f32 %v1469, %v1509
    %v1511 = vpop.f32.mrf.mxu0
    %v1512 = vadd.f32 %v1471, %v1511
    %v1513 = vpop.f32.mrf.mxu0
    %v1514 = vpop.f32.mrf.mxu0
    %1515 = vdwg.mxu0
    %1516 = vmatprep.subr.bf16.mxu0 %v949
    %1517 = vmatpush1.bf16.msra.mxu0 %v948
    %1518 = vmatprep.subr.bf16.mxu0 %v941
    %1519 = vmatpush1.bf16.msra.mxu0 %v940
    %1520 = vmatprep.subr.bf16.mxu0 %v933
    %1521 = vmatpush1.bf16.msra.mxu0 %v932
    %1522 = vmatprep.subr.bf16.mxu0 %v925
    %1523 = vmatpush1.bf16.msra.mxu0 %v924
    %1524 = vmatprep.subr.bf16.mxu0 %v917
    %1525 = vmatpush1.bf16.msra.mxu0 %v916
    %1526 = vmatprep.subr.bf16.mxu0 %v909
    %1527 = vmatpush1.bf16.msra.mxu0 %v908
    %1528 = vmatprep.subr.bf16.mxu0 %v901
    %1529 = vmatpush1.bf16.msra.mxu0 %v900
    %1530 = vmatprep.subr.bf16.mxu0 %v893
    %1531 = vmatpush1.bf16.msra.mxu0 %v892
    %1532 = vmatprep.subr.bf16.mxu0 %v1013
    %1533 = vmatpush2.bf16.msra.mxu0 %v1012
    %1534 = vmatprep.subr.bf16.mxu0 %v1005
    %1535 = vmatpush2.bf16.msra.mxu0 %v1004
    %1536 = vmatprep.subr.bf16.mxu0 %v997
    %1537 = vmatpush2.bf16.msra.mxu0 %v996
    %1538 = vmatprep.subr.bf16.mxu0 %v989
    %1539 = vmatpush2.bf16.msra.mxu0 %v988
    %1540 = vmatprep.subr.bf16.mxu0 %v981
    %1541 = vmatpush2.bf16.msra.mxu0 %v980
    %1542 = vmatprep.subr.bf16.mxu0 %v973
    %1543 = vmatpush2.bf16.msra.mxu0 %v972
    %1544 = vmatprep.subr.bf16.mxu0 %v965
    %1545 = vmatpush2.bf16.msra.mxu0 %v964
    %1546 = vmatprep.subr.bf16.mxu0 %v957
    %1547 = vmatpush2.bf16.msra.mxu0 %v956
    %1548 = vmatprep.mubr.bf16.mxu0 %v72
    %1549 = vmatmul.mubr.bf16.gmra.mxu0 %v69
    %v1550 = vpop.f32.mrf.mxu0
    %v1551 = vadd.f32 %v297, %v1550
    %v1552 = vpop.f32.mrf.mxu0
    %v1553 = vadd.f32 %v301, %v1552
    %v1554 = vpop.f32.mrf.mxu0
    %v1555 = vpop.f32.mrf.mxu0
    %1556 = vdwg.mxu0
    %1557 = vmatprep.subr.bf16.mxu0 %v1077
    %1558 = vmatpush1.bf16.msra.mxu0 %v1076
    %1559 = vmatprep.subr.bf16.mxu0 %v1069
    %1560 = vmatpush1.bf16.msra.mxu0 %v1068
    %1561 = vmatprep.subr.bf16.mxu0 %v1061
    %1562 = vmatpush1.bf16.msra.mxu0 %v1060
    %1563 = vmatprep.subr.bf16.mxu0 %v1053
    %1564 = vmatpush1.bf16.msra.mxu0 %v1052
    %1565 = vmatprep.subr.bf16.mxu0 %v1045
    %1566 = vmatpush1.bf16.msra.mxu0 %v1044
    %1567 = vmatprep.subr.bf16.mxu0 %v1037
    %1568 = vmatpush1.bf16.msra.mxu0 %v1036
    %1569 = vmatprep.subr.bf16.mxu0 %v1029
    %1570 = vmatpush1.bf16.msra.mxu0 %v1028
    %1571 = vmatprep.subr.bf16.mxu0 %v1021
    %1572 = vmatpush1.bf16.msra.mxu0 %v1020
    %1573 = vmatprep.subr.bf16.mxu0 0
    %1574 = vmatpush2.bf16.msra.mxu0 0
    %1575 = vmatprep.subr.bf16.mxu0 0
    %1576 = vmatpush2.bf16.msra.mxu0 0
    %1577 = vmatprep.subr.bf16.mxu0 0
    %1578 = vmatpush2.bf16.msra.mxu0 0
    %1579 = vmatprep.subr.bf16.mxu0 0
    %1580 = vmatpush2.bf16.msra.mxu0 0
    %1581 = vmatprep.subr.bf16.mxu0 0
    %1582 = vmatpush2.bf16.msra.mxu0 0
    %1583 = vmatprep.subr.bf16.mxu0 0
    %1584 = vmatpush2.bf16.msra.mxu0 0
    %1585 = vmatprep.subr.bf16.mxu0 0
    %1586 = vmatpush2.bf16.msra.mxu0 0
    %1587 = vmatprep.subr.bf16.mxu0 0
    %1588 = vmatpush2.bf16.msra.mxu0 0
    %1589 = vmatprep.mubr.bf16.mxu0 0
    %1590 = vmatmul.mubr.bf16.gmra.mxu0 %v75
    %v1591 = vpop.f32.mrf.mxu0
    %v1592 = vadd.f32 %v1551, %v1591
    %v1593 = vpop.f32.mrf.mxu0
    %v1594 = vadd.f32 %v1553, %v1593
    %v1595 = vpop.f32.mrf.mxu0
    %v1596 = vpop.f32.mrf.mxu0
    %1597 = vdwg.mxu0
    %v1598 = vand.u32 2147483647, %v1346
    %vm1599 = vcmp.le.f32.partialorder %v1598, 0.7853982
    %vm1600 = vcmp.lt.s32.totalorder %v1346, 0
    %v1601 = vand.u32 %v1346, 2139095040
    %v1602 = vshrl.u32 %v1601, 23
    %v1603 = vsub.s32 %v1602, 127
    %v1604 = vand.u32 2147483647, %v1346
    %v1605 = vand.u32 %v1604, 8388607
    %v1606 = vor.u32 %v1605, 8388608
    %v1607 = vsub.s32 0, %v1606
    %v1608 = vadd.s32 %v1603, 1
    %vm1609 = vcmp.gt.s32.totalorder %v1608, 0
    %v1610 = vsel %vm1609, %v1608, 0
    %v1611 = vshrl.u32 %v1610, 5
    %v1612 = vand.u32 %v1610, 31
    %v1613 = vsub.s32 32, %v1612
    %v1614 = vshrl.u32 683565275, %v1613
    %v1615 = vshll.u32 683565275, %v1612
    %v1616 = vshrl.u32 2475754826, %v1613
    %v1617 = vor.u32 %v1615, %v1616
    %v1618 = vshll.u32 2475754826, %v1612
    %v1619 = vshrl.u32 2131351028, %v1613
    %v1620 = vor.u32 %v1618, %v1619
    %v1621 = vshll.u32 2131351028, %v1612
    %v1622 = vshrl.u32 2102212464, %v1613
    %v1623 = vor.u32 %v1621, %v1622
    %v1624 = vshll.u32 2102212464, %v1612
    %v1625 = vshrl.u32 920167782, %v1613
    %v1626 = vor.u32 %v1624, %v1625
    %v1627 = vshll.u32 920167782, %v1612
    %v1628 = vshrl.u32 1326507024, %v1613
    %v1629 = vor.u32 %v1627, %v1628
    %vm1630 = vcmp.lt.s32.totalorder %v1611, 1
    %vm1631 = vcmp.lt.s32.totalorder %v1611, 2
    %vm1632 = vcmp.lt.s32.totalorder %v1611, 3
    %vm1633 = vcmp.lt.s32.totalorder %v1611, 4
    %v1634 = vsel %vm1630, %v1614, %v1617
    %v1635 = vsel %vm1633, %v1623, 2102212464
    %v1636 = vsel %vm1632, %v1620, %v1635
    %v1637 = vsel %vm1631, %v1634, %v1636
    %v1638 = vsel %vm1630, %v1617, %v1620
    %v1639 = vsel %vm1633, %v1626, 920167782
    %v1640 = vsel %vm1632, %v1623, %v1639
    %v1641 = vsel %vm1631, %v1638, %v1640
    %v1642 = vsel %vm1630, %v1620, %v1623
    %v1643 = vsel %vm1633, %v1629, 1326507024
    %v1644 = vsel %vm1632, %v1626, %v1643
    %v1645 = vsel %vm1631, %v1642, %v1644
    %v1646 = vshll.u32 %v1606, 8
    %v1647 = vmul.u32.u64.compose %v1646, %v1645
    %v1648 = vextract.low.u32 %v1647
    %v1649 = vextract.high.u32 %v1647
    %v1650 = vmul.u32.u64.compose %v1646, %v1641
    %v1651 = vextract.low.u32 %v1650
    %v1652 = vextract.high.u32 %v1650
    %v1653 = vmul.u32 %v1646, %v1637
    %v1654 = vadd.s32 %v1649, %v1651
    %vm1655 = vc.u32 %v1649, %v1651
    %v1656 = vadd.s32 %v1652, 1
    %v1657 = vsel %vm1655, %v1656, %v1652
    %v1658 = vadd.s32 %v1653, %v1657
    %v1659 = vadd.s32 %v1658, 536870912
    %v1660 = vshrl.u32 %v1659, 30
    %v1661 = vshll.u32 %v1660, 30
    %v1662 = vsub.s32 %v1658, %v1661
    %vm1663 = vcmp.lt.s32.totalorder %v1662, 0
    %v1664 = vsub.s32 0, %v1662
    %v1665 = vsel %vm1663, %v1664, %v1662
    %v1666 = vclz %v1665
    %v1667 = vsub.s32 %v1666, 2
    %vm1668 = vcmp.gt.s32.totalorder 0, %v1667
    %v1669 = vsel %vm1668, 0, %v1667
    %v1670 = vsub.s32 32, %v1669
    %v1671 = vshll.u32 %v1662, %v1669
    %v1672 = vshrl.u32 %v1654, %v1670
    %v1673 = vor.u32 %v1671, %v1672
    %v1674 = vsub.s32 4294967266, %v1669
    %v1675 = vadd.s32 %v1674, 127
    %v1676 = vshll.u32 %v1675, 23
    %v1677 = vor.u32 4788187, %v1676
    %v1678 = vand.u32 2147483647, %v1677
    %v1680 = vcvt.s32.f32 %v1673
    %v1681 = vmul.f32 %v1680, %v1678
    %v1682 = vxor.u32 %v1681, 2147483648
    %v1683 = vsel %vm1600, %v1682, %v1681
    %v1684 = vsub.s32 4, %v1660
    %v1685 = vsel %vm1600, %v1684, %v1660
    %v1686 = vsel %vm1599, %v1346, %v1683
    %v1687 = vsel %vm1599, 0, %v1685
    %v1688 = vcosq.f32.pop %v1686
    %v1689 = vsinq.f32.pop %v1686
    %vm1690 = vweird.f32 %v1346
    %v1691 = vadd.s32 %v1687, 3
    %v1692 = vand.u32 %v1691, 3
    %vm1693 = vcmp.lt.s32.totalorder %v1692, 2
    %vm1694 = vcmp.eq.s32.totalorder %v1692, 0
    %v1695 = vxor.u32 %v1689, 2147483648
    %v1696 = vsel %vm1694, %v1688, %v1695
    %vm1697 = vcmp.eq.s32.totalorder %v1692, 2
    %v1698 = vxor.u32 %v1688, 2147483648
    %v1699 = vsel %vm1697, %v1698, %v1689
    %v1700 = vsel %vm1693, %v1696, %v1699
    %v1701 = vsel %vm1690, nan, %v1700
    %v1702 = vand.u32 2147483647, %v1348
    %vm1703 = vcmp.le.f32.partialorder %v1702, 0.7853982
    %vm1704 = vcmp.lt.s32.totalorder %v1348, 0
    %v1705 = vand.u32 %v1348, 2139095040
    %v1706 = vshrl.u32 %v1705, 23
    %v1707 = vsub.s32 %v1706, 127
    %v1708 = vand.u32 2147483647, %v1348
    %v1709 = vand.u32 %v1708, 8388607
    %v1710 = vor.u32 %v1709, 8388608
    %v1711 = vsub.s32 0, %v1710
    %v1712 = vadd.s32 %v1707, 1
    %vm1713 = vcmp.gt.s32.totalorder %v1712, 0
    %v1714 = vsel %vm1713, %v1712, 0
    %v1715 = vshrl.u32 %v1714, 5
    %v1716 = vand.u32 %v1714, 31
    %v1717 = vsub.s32 32, %v1716
    %v1718 = vshrl.u32 683565275, %v1717
    %v1719 = vshll.u32 683565275, %v1716
    %v1720 = vshrl.u32 2475754826, %v1717
    %v1721 = vor.u32 %v1719, %v1720
    %v1722 = vshll.u32 2475754826, %v1716
    %v1723 = vshrl.u32 2131351028, %v1717
    %v1724 = vor.u32 %v1722, %v1723
    %v1725 = vshll.u32 2131351028, %v1716
    %v1726 = vshrl.u32 2102212464, %v1717
    %v1727 = vor.u32 %v1725, %v1726
    %v1728 = vshll.u32 2102212464, %v1716
    %v1729 = vshrl.u32 920167782, %v1717
    %v1730 = vor.u32 %v1728, %v1729
    %v1731 = vshll.u32 920167782, %v1716
    %v1732 = vshrl.u32 1326507024, %v1717
    %v1733 = vor.u32 %v1731, %v1732
    %vm1734 = vcmp.lt.s32.totalorder %v1715, 1
    %vm1735 = vcmp.lt.s32.totalorder %v1715, 2
    %vm1736 = vcmp.lt.s32.totalorder %v1715, 3
    %vm1737 = vcmp.lt.s32.totalorder %v1715, 4
    %v1738 = vsel %vm1734, %v1718, %v1721
    %v1739 = vsel %vm1737, %v1727, 2102212464
    %v1740 = vsel %vm1736, %v1724, %v1739
    %v1741 = vsel %vm1735, %v1738, %v1740
    %v1742 = vsel %vm1734, %v1721, %v1724
    %v1743 = vsel %vm1737, %v1730, 920167782
    %v1744 = vsel %vm1736, %v1727, %v1743
    %v1745 = vsel %vm1735, %v1742, %v1744
    %v1746 = vsel %vm1734, %v1724, %v1727
    %v1747 = vsel %vm1737, %v1733, 1326507024
    %v1748 = vsel %vm1736, %v1730, %v1747
    %v1749 = vsel %vm1735, %v1746, %v1748
    %v1750 = vshll.u32 %v1710, 8
    %v1751 = vmul.u32.u64.compose %v1750, %v1749
    %v1752 = vextract.low.u32 %v1751
    %v1753 = vextract.high.u32 %v1751
    %v1754 = vmul.u32.u64.compose %v1750, %v1745
    %v1755 = vextract.low.u32 %v1754
    %v1756 = vextract.high.u32 %v1754
    %v1757 = vmul.u32 %v1750, %v1741
    %v1758 = vadd.s32 %v1753, %v1755
    %vm1759 = vc.u32 %v1753, %v1755
    %v1760 = vadd.s32 %v1756, 1
    %v1761 = vsel %vm1759, %v1760, %v1756
    %v1762 = vadd.s32 %v1757, %v1761
    %v1763 = vadd.s32 %v1762, 536870912
    %v1764 = vshrl.u32 %v1763, 30
    %v1765 = vshll.u32 %v1764, 30
    %v1766 = vsub.s32 %v1762, %v1765
    %vm1767 = vcmp.lt.s32.totalorder %v1766, 0
    %v1768 = vsub.s32 0, %v1766
    %v1769 = vsel %vm1767, %v1768, %v1766
    %v1770 = vclz %v1769
    %v1771 = vsub.s32 %v1770, 2
    %vm1772 = vcmp.gt.s32.totalorder 0, %v1771
    %v1773 = vsel %vm1772, 0, %v1771
    %v1774 = vsub.s32 32, %v1773
    %v1775 = vshll.u32 %v1766, %v1773
    %v1776 = vshrl.u32 %v1758, %v1774
    %v1777 = vor.u32 %v1775, %v1776
    %v1778 = vsub.s32 4294967266, %v1773
    %v1779 = vadd.s32 %v1778, 127
    %v1780 = vshll.u32 %v1779, 23
    %v1781 = vor.u32 4788187, %v1780
    %v1782 = vand.u32 2147483647, %v1781
    %v1784 = vcvt.s32.f32 %v1777
    %v1785 = vmul.f32 %v1784, %v1782
    %v1786 = vxor.u32 %v1785, 2147483648
    %v1787 = vsel %vm1704, %v1786, %v1785
    %v1788 = vsub.s32 4, %v1764
    %v1789 = vsel %vm1704, %v1788, %v1764
    %v1790 = vsel %vm1703, %v1348, %v1787
    %v1791 = vsel %vm1703, 0, %v1789
    %v1792 = vcosq.f32.pop %v1790
    %v1793 = vsinq.f32.pop %v1790
    %vm1794 = vweird.f32 %v1348
    %v1795 = vadd.s32 %v1791, 3
    %v1796 = vand.u32 %v1795, 3
    %vm1797 = vcmp.lt.s32.totalorder %v1796, 2
    %vm1798 = vcmp.eq.s32.totalorder %v1796, 0
    %v1799 = vxor.u32 %v1793, 2147483648
    %v1800 = vsel %vm1798, %v1792, %v1799
    %vm1801 = vcmp.eq.s32.totalorder %v1796, 2
    %v1802 = vxor.u32 %v1792, 2147483648
    %v1803 = vsel %vm1801, %v1802, %v1793
    %v1804 = vsel %vm1797, %v1800, %v1803
    %v1805 = vsel %vm1794, nan, %v1804
    %v1806 = vand.u32 2147483647, %v1428
    %vm1807 = vcmp.le.f32.partialorder %v1806, 0.7853982
    %vm1808 = vcmp.lt.s32.totalorder %v1428, 0
    %v1809 = vand.u32 %v1428, 2139095040
    %v1810 = vshrl.u32 %v1809, 23
    %v1811 = vsub.s32 %v1810, 127
    %v1812 = vand.u32 2147483647, %v1428
    %v1813 = vand.u32 %v1812, 8388607
    %v1814 = vor.u32 %v1813, 8388608
    %v1815 = vsub.s32 0, %v1814
    %v1816 = vadd.s32 %v1811, 1
    %vm1817 = vcmp.gt.s32.totalorder %v1816, 0
    %v1818 = vsel %vm1817, %v1816, 0
    %v1819 = vshrl.u32 %v1818, 5
    %v1820 = vand.u32 %v1818, 31
    %v1821 = vsub.s32 32, %v1820
    %v1822 = vshrl.u32 683565275, %v1821
    %v1823 = vshll.u32 683565275, %v1820
    %v1824 = vshrl.u32 2475754826, %v1821
    %v1825 = vor.u32 %v1823, %v1824
    %v1826 = vshll.u32 2475754826, %v1820
    %v1827 = vshrl.u32 2131351028, %v1821
    %v1828 = vor.u32 %v1826, %v1827
    %v1829 = vshll.u32 2131351028, %v1820
    %v1830 = vshrl.u32 2102212464, %v1821
    %v1831 = vor.u32 %v1829, %v1830
    %v1832 = vshll.u32 2102212464, %v1820
    %v1833 = vshrl.u32 920167782, %v1821
    %v1834 = vor.u32 %v1832, %v1833
    %v1835 = vshll.u32 920167782, %v1820
    %v1836 = vshrl.u32 1326507024, %v1821
    %v1837 = vor.u32 %v1835, %v1836
    %vm1838 = vcmp.lt.s32.totalorder %v1819, 1
    %vm1839 = vcmp.lt.s32.totalorder %v1819, 2
    %vm1840 = vcmp.lt.s32.totalorder %v1819, 3
    %vm1841 = vcmp.lt.s32.totalorder %v1819, 4
    %v1842 = vsel %vm1838, %v1822, %v1825
    %v1843 = vsel %vm1841, %v1831, 2102212464
    %v1844 = vsel %vm1840, %v1828, %v1843
    %v1845 = vsel %vm1839, %v1842, %v1844
    %v1846 = vsel %vm1838, %v1825, %v1828
    %v1847 = vsel %vm1841, %v1834, 920167782
    %v1848 = vsel %vm1840, %v1831, %v1847
    %v1849 = vsel %vm1839, %v1846, %v1848
    %v1850 = vsel %vm1838, %v1828, %v1831
    %v1851 = vsel %vm1841, %v1837, 1326507024
    %v1852 = vsel %vm1840, %v1834, %v1851
    %v1853 = vsel %vm1839, %v1850, %v1852
    %v1854 = vshll.u32 %v1814, 8
    %v1855 = vmul.u32.u64.compose %v1854, %v1853
    %v1856 = vextract.low.u32 %v1855
    %v1857 = vextract.high.u32 %v1855
    %v1858 = vmul.u32.u64.compose %v1854, %v1849
    %v1859 = vextract.low.u32 %v1858
    %v1860 = vextract.high.u32 %v1858
    %v1861 = vmul.u32 %v1854, %v1845
    %v1862 = vadd.s32 %v1857, %v1859
    %vm1863 = vc.u32 %v1857, %v1859
    %v1864 = vadd.s32 %v1860, 1
    %v1865 = vsel %vm1863, %v1864, %v1860
    %v1866 = vadd.s32 %v1861, %v1865
    %v1867 = vadd.s32 %v1866, 536870912
    %v1868 = vshrl.u32 %v1867, 30
    %v1869 = vshll.u32 %v1868, 30
    %v1870 = vsub.s32 %v1866, %v1869
    %vm1871 = vcmp.lt.s32.totalorder %v1870, 0
    %v1872 = vsub.s32 0, %v1870
    %v1873 = vsel %vm1871, %v1872, %v1870
    %v1874 = vclz %v1873
    %v1875 = vsub.s32 %v1874, 2
    %vm1876 = vcmp.gt.s32.totalorder 0, %v1875
    %v1877 = vsel %vm1876, 0, %v1875
    %v1878 = vsub.s32 32, %v1877
    %v1879 = vshll.u32 %v1870, %v1877
    %v1880 = vshrl.u32 %v1862, %v1878
    %v1881 = vor.u32 %v1879, %v1880
    %v1882 = vsub.s32 4294967266, %v1877
    %v1883 = vadd.s32 %v1882, 127
    %v1884 = vshll.u32 %v1883, 23
    %v1885 = vor.u32 4788187, %v1884
    %v1886 = vand.u32 2147483647, %v1885
    %v1888 = vcvt.s32.f32 %v1881
    %v1889 = vmul.f32 %v1888, %v1886
    %v1890 = vxor.u32 %v1889, 2147483648
    %v1891 = vsel %vm1808, %v1890, %v1889
    %v1892 = vsub.s32 4, %v1868
    %v1893 = vsel %vm1808, %v1892, %v1868
    %v1894 = vsel %vm1807, %v1428, %v1891
    %v1895 = vsel %vm1807, 0, %v1893
    %v1896 = vcosq.f32.pop %v1894
    %v1897 = vsinq.f32.pop %v1894
    %vm1898 = vweird.f32 %v1428
    %v1899 = vadd.s32 %v1895, 3
    %v1900 = vand.u32 %v1899, 3
    %vm1901 = vcmp.lt.s32.totalorder %v1900, 2
    %vm1902 = vcmp.eq.s32.totalorder %v1900, 0
    %v1903 = vxor.u32 %v1897, 2147483648
    %v1904 = vsel %vm1902, %v1896, %v1903
    %vm1905 = vcmp.eq.s32.totalorder %v1900, 2
    %v1906 = vxor.u32 %v1896, 2147483648
    %v1907 = vsel %vm1905, %v1906, %v1897
    %v1908 = vsel %vm1901, %v1904, %v1907
    %v1909 = vsel %vm1898, nan, %v1908
    %v1910 = vand.u32 2147483647, %v1430
    %vm1911 = vcmp.le.f32.partialorder %v1910, 0.7853982
    %vm1912 = vcmp.lt.s32.totalorder %v1430, 0
    %v1913 = vand.u32 %v1430, 2139095040
    %v1914 = vshrl.u32 %v1913, 23
    %v1915 = vsub.s32 %v1914, 127
    %v1916 = vand.u32 2147483647, %v1430
    %v1917 = vand.u32 %v1916, 8388607
    %v1918 = vor.u32 %v1917, 8388608
    %v1919 = vsub.s32 0, %v1918
    %v1920 = vadd.s32 %v1915, 1
    %vm1921 = vcmp.gt.s32.totalorder %v1920, 0
    %v1922 = vsel %vm1921, %v1920, 0
    %v1923 = vshrl.u32 %v1922, 5
    %v1924 = vand.u32 %v1922, 31
    %v1925 = vsub.s32 32, %v1924
    %v1926 = vshrl.u32 683565275, %v1925
    %v1927 = vshll.u32 683565275, %v1924
    %v1928 = vshrl.u32 2475754826, %v1925
    %v1929 = vor.u32 %v1927, %v1928
    %v1930 = vshll.u32 2475754826, %v1924
    %v1931 = vshrl.u32 2131351028, %v1925
    %v1932 = vor.u32 %v1930, %v1931
    %v1933 = vshll.u32 2131351028, %v1924
    %v1934 = vshrl.u32 2102212464, %v1925
    %v1935 = vor.u32 %v1933, %v1934
    %v1936 = vshll.u32 2102212464, %v1924
    %v1937 = vshrl.u32 920167782, %v1925
    %v1938 = vor.u32 %v1936, %v1937
    %v1939 = vshll.u32 920167782, %v1924
    %v1940 = vshrl.u32 1326507024, %v1925
    %v1941 = vor.u32 %v1939, %v1940
    %vm1942 = vcmp.lt.s32.totalorder %v1923, 1
    %vm1943 = vcmp.lt.s32.totalorder %v1923, 2
    %vm1944 = vcmp.lt.s32.totalorder %v1923, 3
    %vm1945 = vcmp.lt.s32.totalorder %v1923, 4
    %v1946 = vsel %vm1942, %v1926, %v1929
    %v1947 = vsel %vm1945, %v1935, 2102212464
    %v1948 = vsel %vm1944, %v1932, %v1947
    %v1949 = vsel %vm1943, %v1946, %v1948
    %v1950 = vsel %vm1942, %v1929, %v1932
    %v1951 = vsel %vm1945, %v1938, 920167782
    %v1952 = vsel %vm1944, %v1935, %v1951
    %v1953 = vsel %vm1943, %v1950, %v1952
    %v1954 = vsel %vm1942, %v1932, %v1935
    %v1955 = vsel %vm1945, %v1941, 1326507024
    %v1956 = vsel %vm1944, %v1938, %v1955
    %v1957 = vsel %vm1943, %v1954, %v1956
    %v1958 = vshll.u32 %v1918, 8
    %v1959 = vmul.u32.u64.compose %v1958, %v1957
    %v1960 = vextract.low.u32 %v1959
    %v1961 = vextract.high.u32 %v1959
    %v1962 = vmul.u32.u64.compose %v1958, %v1953
    %v1963 = vextract.low.u32 %v1962
    %v1964 = vextract.high.u32 %v1962
    %v1965 = vmul.u32 %v1958, %v1949
    %v1966 = vadd.s32 %v1961, %v1963
    %vm1967 = vc.u32 %v1961, %v1963
    %v1968 = vadd.s32 %v1964, 1
    %v1969 = vsel %vm1967, %v1968, %v1964
    %v1970 = vadd.s32 %v1965, %v1969
    %v1971 = vadd.s32 %v1970, 536870912
    %v1972 = vshrl.u32 %v1971, 30
    %v1973 = vshll.u32 %v1972, 30
    %v1974 = vsub.s32 %v1970, %v1973
    %vm1975 = vcmp.lt.s32.totalorder %v1974, 0
    %v1976 = vsub.s32 0, %v1974
    %v1977 = vsel %vm1975, %v1976, %v1974
    %v1978 = vclz %v1977
    %v1979 = vsub.s32 %v1978, 2
    %vm1980 = vcmp.gt.s32.totalorder 0, %v1979
    %v1981 = vsel %vm1980, 0, %v1979
    %v1982 = vsub.s32 32, %v1981
    %v1983 = vshll.u32 %v1974, %v1981
    %v1984 = vshrl.u32 %v1966, %v1982
    %v1985 = vor.u32 %v1983, %v1984
    %v1986 = vsub.s32 4294967266, %v1981
    %v1987 = vadd.s32 %v1986, 127
    %v1988 = vshll.u32 %v1987, 23
    %v1989 = vor.u32 4788187, %v1988
    %v1990 = vand.u32 2147483647, %v1989
    %v1992 = vcvt.s32.f32 %v1985
    %v1993 = vmul.f32 %v1992, %v1990
    %v1994 = vxor.u32 %v1993, 2147483648
    %v1995 = vsel %vm1912, %v1994, %v1993
    %v1996 = vsub.s32 4, %v1972
    %v1997 = vsel %vm1912, %v1996, %v1972
    %v1998 = vsel %vm1911, %v1430, %v1995
    %v1999 = vsel %vm1911, 0, %v1997
    %v2000 = vcosq.f32.pop %v1998
    %v2001 = vsinq.f32.pop %v1998
    %vm2002 = vweird.f32 %v1430
    %v2003 = vadd.s32 %v1999, 3
    %v2004 = vand.u32 %v2003, 3
    %vm2005 = vcmp.lt.s32.totalorder %v2004, 2
    %vm2006 = vcmp.eq.s32.totalorder %v2004, 0
    %v2007 = vxor.u32 %v2001, 2147483648
    %v2008 = vsel %vm2006, %v2000, %v2007
    %vm2009 = vcmp.eq.s32.totalorder %v2004, 2
    %v2010 = vxor.u32 %v2000, 2147483648
    %v2011 = vsel %vm2009, %v2010, %v2001
    %v2012 = vsel %vm2005, %v2008, %v2011
    %v2013 = vsel %vm2002, nan, %v2012
    %v2014 = vand.u32 2147483647, %v1510
    %vm2015 = vcmp.le.f32.partialorder %v2014, 0.7853982
    %vm2016 = vcmp.lt.s32.totalorder %v1510, 0
    %v2017 = vand.u32 %v1510, 2139095040
    %v2018 = vshrl.u32 %v2017, 23
    %v2019 = vsub.s32 %v2018, 127
    %v2020 = vand.u32 2147483647, %v1510
    %v2021 = vand.u32 %v2020, 8388607
    %v2022 = vor.u32 %v2021, 8388608
    %v2023 = vsub.s32 0, %v2022
    %v2024 = vadd.s32 %v2019, 1
    %vm2025 = vcmp.gt.s32.totalorder %v2024, 0
    %v2026 = vsel %vm2025, %v2024, 0
    %v2027 = vshrl.u32 %v2026, 5
    %v2028 = vand.u32 %v2026, 31
    %v2029 = vsub.s32 32, %v2028
    %v2030 = vshrl.u32 683565275, %v2029
    %v2031 = vshll.u32 683565275, %v2028
    %v2032 = vshrl.u32 2475754826, %v2029
    %v2033 = vor.u32 %v2031, %v2032
    %v2034 = vshll.u32 2475754826, %v2028
    %v2035 = vshrl.u32 2131351028, %v2029
    %v2036 = vor.u32 %v2034, %v2035
    %v2037 = vshll.u32 2131351028, %v2028
    %v2038 = vshrl.u32 2102212464, %v2029
    %v2039 = vor.u32 %v2037, %v2038
    %v2040 = vshll.u32 2102212464, %v2028
    %v2041 = vshrl.u32 920167782, %v2029
    %v2042 = vor.u32 %v2040, %v2041
    %v2043 = vshll.u32 920167782, %v2028
    %v2044 = vshrl.u32 1326507024, %v2029
    %v2045 = vor.u32 %v2043, %v2044
    %vm2046 = vcmp.lt.s32.totalorder %v2027, 1
    %vm2047 = vcmp.lt.s32.totalorder %v2027, 2
    %vm2048 = vcmp.lt.s32.totalorder %v2027, 3
    %vm2049 = vcmp.lt.s32.totalorder %v2027, 4
    %v2050 = vsel %vm2046, %v2030, %v2033
    %v2051 = vsel %vm2049, %v2039, 2102212464
    %v2052 = vsel %vm2048, %v2036, %v2051
    %v2053 = vsel %vm2047, %v2050, %v2052
    %v2054 = vsel %vm2046, %v2033, %v2036
    %v2055 = vsel %vm2049, %v2042, 920167782
    %v2056 = vsel %vm2048, %v2039, %v2055
    %v2057 = vsel %vm2047, %v2054, %v2056
    %v2058 = vsel %vm2046, %v2036, %v2039
    %v2059 = vsel %vm2049, %v2045, 1326507024
    %v2060 = vsel %vm2048, %v2042, %v2059
    %v2061 = vsel %vm2047, %v2058, %v2060
    %v2062 = vshll.u32 %v2022, 8
    %v2063 = vmul.u32.u64.compose %v2062, %v2061
    %v2064 = vextract.low.u32 %v2063
    %v2065 = vextract.high.u32 %v2063
    %v2066 = vmul.u32.u64.compose %v2062, %v2057
    %v2067 = vextract.low.u32 %v2066
    %v2068 = vextract.high.u32 %v2066
    %v2069 = vmul.u32 %v2062, %v2053
    %v2070 = vadd.s32 %v2065, %v2067
    %vm2071 = vc.u32 %v2065, %v2067
    %v2072 = vadd.s32 %v2068, 1
    %v2073 = vsel %vm2071, %v2072, %v2068
    %v2074 = vadd.s32 %v2069, %v2073
    %v2075 = vadd.s32 %v2074, 536870912
    %v2076 = vshrl.u32 %v2075, 30
    %v2077 = vshll.u32 %v2076, 30
    %v2078 = vsub.s32 %v2074, %v2077
    %vm2079 = vcmp.lt.s32.totalorder %v2078, 0
    %v2080 = vsub.s32 0, %v2078
    %v2081 = vsel %vm2079, %v2080, %v2078
    %v2082 = vclz %v2081
    %v2083 = vsub.s32 %v2082, 2
    %vm2084 = vcmp.gt.s32.totalorder 0, %v2083
    %v2085 = vsel %vm2084, 0, %v2083
    %v2086 = vsub.s32 32, %v2085
    %v2087 = vshll.u32 %v2078, %v2085
    %v2088 = vshrl.u32 %v2070, %v2086
    %v2089 = vor.u32 %v2087, %v2088
    %v2090 = vsub.s32 4294967266, %v2085
    %v2091 = vadd.s32 %v2090, 127
    %v2092 = vshll.u32 %v2091, 23
    %v2093 = vor.u32 4788187, %v2092
    %v2094 = vand.u32 2147483647, %v2093
    %v2096 = vcvt.s32.f32 %v2089
    %v2097 = vmul.f32 %v2096, %v2094
    %v2098 = vxor.u32 %v2097, 2147483648
    %v2099 = vsel %vm2016, %v2098, %v2097
    %v2100 = vsub.s32 4, %v2076
    %v2101 = vsel %vm2016, %v2100, %v2076
    %v2102 = vsel %vm2015, %v1510, %v2099
    %v2103 = vsel %vm2015, 0, %v2101
    %v2104 = vcosq.f32.pop %v2102
    %v2105 = vsinq.f32.pop %v2102
    %vm2106 = vweird.f32 %v1510
    %v2107 = vadd.s32 %v2103, 3
    %v2108 = vand.u32 %v2107, 3
    %vm2109 = vcmp.lt.s32.totalorder %v2108, 2
    %vm2110 = vcmp.eq.s32.totalorder %v2108, 0
    %v2111 = vxor.u32 %v2105, 2147483648
    %v2112 = vsel %vm2110, %v2104, %v2111
    %vm2113 = vcmp.eq.s32.totalorder %v2108, 2
    %v2114 = vxor.u32 %v2104, 2147483648
    %v2115 = vsel %vm2113, %v2114, %v2105
    %v2116 = vsel %vm2109, %v2112, %v2115
    %v2117 = vsel %vm2106, nan, %v2116
    %v2118 = vand.u32 2147483647, %v1512
    %vm2119 = vcmp.le.f32.partialorder %v2118, 0.7853982
    %vm2120 = vcmp.lt.s32.totalorder %v1512, 0
    %v2121 = vand.u32 %v1512, 2139095040
    %v2122 = vshrl.u32 %v2121, 23
    %v2123 = vsub.s32 %v2122, 127
    %v2124 = vand.u32 2147483647, %v1512
    %v2125 = vand.u32 %v2124, 8388607
    %v2126 = vor.u32 %v2125, 8388608
    %v2127 = vsub.s32 0, %v2126
    %v2128 = vadd.s32 %v2123, 1
    %vm2129 = vcmp.gt.s32.totalorder %v2128, 0
    %v2130 = vsel %vm2129, %v2128, 0
    %v2131 = vshrl.u32 %v2130, 5
    %v2132 = vand.u32 %v2130, 31
    %v2133 = vsub.s32 32, %v2132
    %v2134 = vshrl.u32 683565275, %v2133
    %v2135 = vshll.u32 683565275, %v2132
    %v2136 = vshrl.u32 2475754826, %v2133
    %v2137 = vor.u32 %v2135, %v2136
    %v2138 = vshll.u32 2475754826, %v2132
    %v2139 = vshrl.u32 2131351028, %v2133
    %v2140 = vor.u32 %v2138, %v2139
    %v2141 = vshll.u32 2131351028, %v2132
    %v2142 = vshrl.u32 2102212464, %v2133
    %v2143 = vor.u32 %v2141, %v2142
    %v2144 = vshll.u32 2102212464, %v2132
    %v2145 = vshrl.u32 920167782, %v2133
    %v2146 = vor.u32 %v2144, %v2145
    %v2147 = vshll.u32 920167782, %v2132
    %v2148 = vshrl.u32 1326507024, %v2133
    %v2149 = vor.u32 %v2147, %v2148
    %vm2150 = vcmp.lt.s32.totalorder %v2131, 1
    %vm2151 = vcmp.lt.s32.totalorder %v2131, 2
    %vm2152 = vcmp.lt.s32.totalorder %v2131, 3
    %vm2153 = vcmp.lt.s32.totalorder %v2131, 4
    %v2154 = vsel %vm2150, %v2134, %v2137
    %v2155 = vsel %vm2153, %v2143, 2102212464
    %v2156 = vsel %vm2152, %v2140, %v2155
    %v2157 = vsel %vm2151, %v2154, %v2156
    %v2158 = vsel %vm2150, %v2137, %v2140
    %v2159 = vsel %vm2153, %v2146, 920167782
    %v2160 = vsel %vm2152, %v2143, %v2159
    %v2161 = vsel %vm2151, %v2158, %v2160
    %v2162 = vsel %vm2150, %v2140, %v2143
    %v2163 = vsel %vm2153, %v2149, 1326507024
    %v2164 = vsel %vm2152, %v2146, %v2163
    %v2165 = vsel %vm2151, %v2162, %v2164
    %v2166 = vshll.u32 %v2126, 8
    %v2167 = vmul.u32.u64.compose %v2166, %v2165
    %v2168 = vextract.low.u32 %v2167
    %v2169 = vextract.high.u32 %v2167
    %v2170 = vmul.u32.u64.compose %v2166, %v2161
    %v2171 = vextract.low.u32 %v2170
    %v2172 = vextract.high.u32 %v2170
    %v2173 = vmul.u32 %v2166, %v2157
    %v2174 = vadd.s32 %v2169, %v2171
    %vm2175 = vc.u32 %v2169, %v2171
    %v2176 = vadd.s32 %v2172, 1
    %v2177 = vsel %vm2175, %v2176, %v2172
    %v2178 = vadd.s32 %v2173, %v2177
    %v2179 = vadd.s32 %v2178, 536870912
    %v2180 = vshrl.u32 %v2179, 30
    %v2181 = vshll.u32 %v2180, 30
    %v2182 = vsub.s32 %v2178, %v2181
    %vm2183 = vcmp.lt.s32.totalorder %v2182, 0
    %v2184 = vsub.s32 0, %v2182
    %v2185 = vsel %vm2183, %v2184, %v2182
    %v2186 = vclz %v2185
    %v2187 = vsub.s32 %v2186, 2
    %vm2188 = vcmp.gt.s32.totalorder 0, %v2187
    %v2189 = vsel %vm2188, 0, %v2187
    %v2190 = vsub.s32 32, %v2189
    %v2191 = vshll.u32 %v2182, %v2189
    %v2192 = vshrl.u32 %v2174, %v2190
    %v2193 = vor.u32 %v2191, %v2192
    %v2194 = vsub.s32 4294967266, %v2189
    %v2195 = vadd.s32 %v2194, 127
    %v2196 = vshll.u32 %v2195, 23
    %v2197 = vor.u32 4788187, %v2196
    %v2198 = vand.u32 2147483647, %v2197
    %v2200 = vcvt.s32.f32 %v2193
    %v2201 = vmul.f32 %v2200, %v2198
    %v2202 = vxor.u32 %v2201, 2147483648
    %v2203 = vsel %vm2120, %v2202, %v2201
    %v2204 = vsub.s32 4, %v2180
    %v2205 = vsel %vm2120, %v2204, %v2180
    %v2206 = vsel %vm2119, %v1512, %v2203
    %v2207 = vsel %vm2119, 0, %v2205
    %v2208 = vcosq.f32.pop %v2206
    %v2209 = vsinq.f32.pop %v2206
    %vm2210 = vweird.f32 %v1512
    %v2211 = vadd.s32 %v2207, 3
    %v2212 = vand.u32 %v2211, 3
    %vm2213 = vcmp.lt.s32.totalorder %v2212, 2
    %vm2214 = vcmp.eq.s32.totalorder %v2212, 0
    %v2215 = vxor.u32 %v2209, 2147483648
    %v2216 = vsel %vm2214, %v2208, %v2215
    %vm2217 = vcmp.eq.s32.totalorder %v2212, 2
    %v2218 = vxor.u32 %v2208, 2147483648
    %v2219 = vsel %vm2217, %v2218, %v2209
    %v2220 = vsel %vm2213, %v2216, %v2219
    %v2221 = vsel %vm2210, nan, %v2220
    %v2222 = vand.u32 2147483647, %v1592
    %vm2223 = vcmp.le.f32.partialorder %v2222, 0.7853982
    %vm2224 = vcmp.lt.s32.totalorder %v1592, 0
    %v2225 = vand.u32 %v1592, 2139095040
    %v2226 = vshrl.u32 %v2225, 23
    %v2227 = vsub.s32 %v2226, 127
    %v2228 = vand.u32 2147483647, %v1592
    %v2229 = vand.u32 %v2228, 8388607
    %v2230 = vor.u32 %v2229, 8388608
    %v2231 = vsub.s32 0, %v2230
    %v2232 = vadd.s32 %v2227, 1
    %vm2233 = vcmp.gt.s32.totalorder %v2232, 0
    %v2234 = vsel %vm2233, %v2232, 0
    %v2235 = vshrl.u32 %v2234, 5
    %v2236 = vand.u32 %v2234, 31
    %v2237 = vsub.s32 32, %v2236
    %v2238 = vshrl.u32 683565275, %v2237
    %v2239 = vshll.u32 683565275, %v2236
    %v2240 = vshrl.u32 2475754826, %v2237
    %v2241 = vor.u32 %v2239, %v2240
    %v2242 = vshll.u32 2475754826, %v2236
    %v2243 = vshrl.u32 2131351028, %v2237
    %v2244 = vor.u32 %v2242, %v2243
    %v2245 = vshll.u32 2131351028, %v2236
    %v2246 = vshrl.u32 2102212464, %v2237
    %v2247 = vor.u32 %v2245, %v2246
    %v2248 = vshll.u32 2102212464, %v2236
    %v2249 = vshrl.u32 920167782, %v2237
    %v2250 = vor.u32 %v2248, %v2249
    %v2251 = vshll.u32 920167782, %v2236
    %v2252 = vshrl.u32 1326507024, %v2237
    %v2253 = vor.u32 %v2251, %v2252
    %vm2254 = vcmp.lt.s32.totalorder %v2235, 1
    %vm2255 = vcmp.lt.s32.totalorder %v2235, 2
    %vm2256 = vcmp.lt.s32.totalorder %v2235, 3
    %vm2257 = vcmp.lt.s32.totalorder %v2235, 4
    %v2258 = vsel %vm2254, %v2238, %v2241
    %v2259 = vsel %vm2257, %v2247, 2102212464
    %v2260 = vsel %vm2256, %v2244, %v2259
    %v2261 = vsel %vm2255, %v2258, %v2260
    %v2262 = vsel %vm2254, %v2241, %v2244
    %v2263 = vsel %vm2257, %v2250, 920167782
    %v2264 = vsel %vm2256, %v2247, %v2263
    %v2265 = vsel %vm2255, %v2262, %v2264
    %v2266 = vsel %vm2254, %v2244, %v2247
    %v2267 = vsel %vm2257, %v2253, 1326507024
    %v2268 = vsel %vm2256, %v2250, %v2267
    %v2269 = vsel %vm2255, %v2266, %v2268
    %v2270 = vshll.u32 %v2230, 8
    %v2271 = vmul.u32.u64.compose %v2270, %v2269
    %v2272 = vextract.low.u32 %v2271
    %v2273 = vextract.high.u32 %v2271
    %v2274 = vmul.u32.u64.compose %v2270, %v2265
    %v2275 = vextract.low.u32 %v2274
    %v2276 = vextract.high.u32 %v2274
    %v2277 = vmul.u32 %v2270, %v2261
    %v2278 = vadd.s32 %v2273, %v2275
    %vm2279 = vc.u32 %v2273, %v2275
    %v2280 = vadd.s32 %v2276, 1
    %v2281 = vsel %vm2279, %v2280, %v2276
    %v2282 = vadd.s32 %v2277, %v2281
    %v2283 = vadd.s32 %v2282, 536870912
    %v2284 = vshrl.u32 %v2283, 30
    %v2285 = vshll.u32 %v2284, 30
    %v2286 = vsub.s32 %v2282, %v2285
    %vm2287 = vcmp.lt.s32.totalorder %v2286, 0
    %v2288 = vsub.s32 0, %v2286
    %v2289 = vsel %vm2287, %v2288, %v2286
    %v2290 = vclz %v2289
    %v2291 = vsub.s32 %v2290, 2
    %vm2292 = vcmp.gt.s32.totalorder 0, %v2291
    %v2293 = vsel %vm2292, 0, %v2291
    %v2294 = vsub.s32 32, %v2293
    %v2295 = vshll.u32 %v2286, %v2293
    %v2296 = vshrl.u32 %v2278, %v2294
    %v2297 = vor.u32 %v2295, %v2296
    %v2298 = vsub.s32 4294967266, %v2293
    %v2299 = vadd.s32 %v2298, 127
    %v2300 = vshll.u32 %v2299, 23
    %v2301 = vor.u32 4788187, %v2300
    %v2302 = vand.u32 2147483647, %v2301
    %v2304 = vcvt.s32.f32 %v2297
    %v2305 = vmul.f32 %v2304, %v2302
    %v2306 = vxor.u32 %v2305, 2147483648
    %v2307 = vsel %vm2224, %v2306, %v2305
    %v2308 = vsub.s32 4, %v2284
    %v2309 = vsel %vm2224, %v2308, %v2284
    %v2310 = vsel %vm2223, %v1592, %v2307
    %v2311 = vsel %vm2223, 0, %v2309
    %v2312 = vcosq.f32.pop %v2310
    %v2313 = vsinq.f32.pop %v2310
    %vm2314 = vweird.f32 %v1592
    %v2315 = vadd.s32 %v2311, 3
    %v2316 = vand.u32 %v2315, 3
    %vm2317 = vcmp.lt.s32.totalorder %v2316, 2
    %vm2318 = vcmp.eq.s32.totalorder %v2316, 0
    %v2319 = vxor.u32 %v2313, 2147483648
    %v2320 = vsel %vm2318, %v2312, %v2319
    %vm2321 = vcmp.eq.s32.totalorder %v2316, 2
    %v2322 = vxor.u32 %v2312, 2147483648
    %v2323 = vsel %vm2321, %v2322, %v2313
    %v2324 = vsel %vm2317, %v2320, %v2323
    %v2325 = vsel %vm2314, nan, %v2324
    %v2326 = vand.u32 2147483647, %v1594
    %vm2327 = vcmp.le.f32.partialorder %v2326, 0.7853982
    %vm2328 = vcmp.lt.s32.totalorder %v1594, 0
    %v2329 = vand.u32 %v1594, 2139095040
    %v2330 = vshrl.u32 %v2329, 23
    %v2331 = vsub.s32 %v2330, 127
    %v2332 = vand.u32 2147483647, %v1594
    %v2333 = vand.u32 %v2332, 8388607
    %v2334 = vor.u32 %v2333, 8388608
    %v2335 = vsub.s32 0, %v2334
    %v2336 = vadd.s32 %v2331, 1
    %vm2337 = vcmp.gt.s32.totalorder %v2336, 0
    %v2338 = vsel %vm2337, %v2336, 0
    %v2339 = vshrl.u32 %v2338, 5
    %v2340 = vand.u32 %v2338, 31
    %v2341 = vsub.s32 32, %v2340
    %v2342 = vshrl.u32 683565275, %v2341
    %v2343 = vshll.u32 683565275, %v2340
    %v2344 = vshrl.u32 2475754826, %v2341
    %v2345 = vor.u32 %v2343, %v2344
    %v2346 = vshll.u32 2475754826, %v2340
    %v2347 = vshrl.u32 2131351028, %v2341
    %v2348 = vor.u32 %v2346, %v2347
    %v2349 = vshll.u32 2131351028, %v2340
    %v2350 = vshrl.u32 2102212464, %v2341
    %v2351 = vor.u32 %v2349, %v2350
    %v2352 = vshll.u32 2102212464, %v2340
    %v2353 = vshrl.u32 920167782, %v2341
    %v2354 = vor.u32 %v2352, %v2353
    %v2355 = vshll.u32 920167782, %v2340
    %v2356 = vshrl.u32 1326507024, %v2341
    %v2357 = vor.u32 %v2355, %v2356
    %vm2358 = vcmp.lt.s32.totalorder %v2339, 1
    %vm2359 = vcmp.lt.s32.totalorder %v2339, 2
    %vm2360 = vcmp.lt.s32.totalorder %v2339, 3
    %vm2361 = vcmp.lt.s32.totalorder %v2339, 4
    %v2362 = vsel %vm2358, %v2342, %v2345
    %v2363 = vsel %vm2361, %v2351, 2102212464
    %v2364 = vsel %vm2360, %v2348, %v2363
    %v2365 = vsel %vm2359, %v2362, %v2364
    %v2366 = vsel %vm2358, %v2345, %v2348
    %v2367 = vsel %vm2361, %v2354, 920167782
    %v2368 = vsel %vm2360, %v2351, %v2367
    %v2369 = vsel %vm2359, %v2366, %v2368
    %v2370 = vsel %vm2358, %v2348, %v2351
    %v2371 = vsel %vm2361, %v2357, 1326507024
    %v2372 = vsel %vm2360, %v2354, %v2371
    %v2373 = vsel %vm2359, %v2370, %v2372
    %v2374 = vshll.u32 %v2334, 8
    %v2375 = vmul.u32.u64.compose %v2374, %v2373
    %v2376 = vextract.low.u32 %v2375
    %v2377 = vextract.high.u32 %v2375
    %v2378 = vmul.u32.u64.compose %v2374, %v2369
    %v2379 = vextract.low.u32 %v2378
    %v2380 = vextract.high.u32 %v2378
    %v2381 = vmul.u32 %v2374, %v2365
    %v2382 = vadd.s32 %v2377, %v2379
    %vm2383 = vc.u32 %v2377, %v2379
    %v2384 = vadd.s32 %v2380, 1
    %v2385 = vsel %vm2383, %v2384, %v2380
    %v2386 = vadd.s32 %v2381, %v2385
    %v2387 = vadd.s32 %v2386, 536870912
    %v2388 = vshrl.u32 %v2387, 30
    %v2389 = vshll.u32 %v2388, 30
    %v2390 = vsub.s32 %v2386, %v2389
    %vm2391 = vcmp.lt.s32.totalorder %v2390, 0
    %v2392 = vsub.s32 0, %v2390
    %v2393 = vsel %vm2391, %v2392, %v2390
    %v2394 = vclz %v2393
    %v2395 = vsub.s32 %v2394, 2
    %vm2396 = vcmp.gt.s32.totalorder 0, %v2395
    %v2397 = vsel %vm2396, 0, %v2395
    %v2398 = vsub.s32 32, %v2397
    %v2399 = vshll.u32 %v2390, %v2397
    %v2400 = vshrl.u32 %v2382, %v2398
    %v2401 = vor.u32 %v2399, %v2400
    %v2402 = vsub.s32 4294967266, %v2397
    %v2403 = vadd.s32 %v2402, 127
    %v2404 = vshll.u32 %v2403, 23
    %v2405 = vor.u32 4788187, %v2404
    %v2406 = vand.u32 2147483647, %v2405
    %v2408 = vcvt.s32.f32 %v2401
    %v2409 = vmul.f32 %v2408, %v2406
    %v2410 = vxor.u32 %v2409, 2147483648
    %v2411 = vsel %vm2328, %v2410, %v2409
    %v2412 = vsub.s32 4, %v2388
    %v2413 = vsel %vm2328, %v2412, %v2388
    %v2414 = vsel %vm2327, %v1594, %v2411
    %v2415 = vsel %vm2327, 0, %v2413
    %v2416 = vcosq.f32.pop %v2414
    %v2417 = vsinq.f32.pop %v2414
    %vm2418 = vweird.f32 %v1594
    %v2419 = vadd.s32 %v2415, 3
    %v2420 = vand.u32 %v2419, 3
    %vm2421 = vcmp.lt.s32.totalorder %v2420, 2
    %vm2422 = vcmp.eq.s32.totalorder %v2420, 0
    %v2423 = vxor.u32 %v2417, 2147483648
    %v2424 = vsel %vm2422, %v2416, %v2423
    %vm2425 = vcmp.eq.s32.totalorder %v2420, 2
    %v2426 = vxor.u32 %v2416, 2147483648
    %v2427 = vsel %vm2425, %v2426, %v2417
    %v2428 = vsel %vm2421, %v2424, %v2427
    %v2429 = vsel %vm2418, nan, %v2428
    %v2430 = vld [vmem:[#allocation2] sm:$0xff]
    %v2432 = vlaneseq
    %v2433 = vshrl.u32 %v2432, 7
    %v2434 = vsub.s32 0, %v2433
    %v2435 = vrot.slane %v2430, %v2434
    %v2436 = vlaneseq
    %v2437 = vshrl.u32 %v2436, 7
    %v2438 = vsub.s32 1, %v2437
    %v2439 = vrot.slane %v2430, %v2438
    %v2440 = vlaneseq
    %v2441 = vshrl.u32 %v2440, 7
    %v2442 = vsub.s32 2, %v2441
    %v2443 = vrot.slane %v2430, %v2442
    %v2444 = vlaneseq
    %v2445 = vshrl.u32 %v2444, 7
    %v2446 = vsub.s32 3, %v2445
    %v2447 = vrot.slane %v2430, %v2446
    %v2448 = vlaneseq
    %v2449 = vshrl.u32 %v2448, 7
    %v2450 = vsub.s32 4, %v2449
    %v2451 = vrot.slane %v2430, %v2450
    %v2452 = vlaneseq
    %v2453 = vshrl.u32 %v2452, 7
    %v2454 = vsub.s32 5, %v2453
    %v2455 = vrot.slane %v2430, %v2454
    %v2456 = vlaneseq
    %v2457 = vshrl.u32 %v2456, 7
    %v2458 = vsub.s32 6, %v2457
    %v2459 = vrot.slane %v2430, %v2458
    %v2460 = vlaneseq
    %v2461 = vshrl.u32 %v2460, 7
    %v2462 = vsub.s32 7, %v2461
    %v2463 = vrot.slane %v2430, %v2462
    %v2472 = vmul.f32 %v1701, %v2435
    %v2473 = vmul.f32 %v1805, %v2439
    %v2474 = vmul.f32 %v1909, %v2443
    %v2475 = vmul.f32 %v2013, %v2447
    %v2476 = vmul.f32 %v2117, %v2451
    %v2477 = vmul.f32 %v2221, %v2455
    %v2478 = vmul.f32 %v2325, %v2459
    %v2479 = vmul.f32 %v2429, %v2463
    %2480 = vst [vmem:[#allocation10] sm:$0xff] %v2472
    %2481 = vst [vmem:[#allocation10 + $0x8] sm:$0xff] %v2473
    %2482 = vst [vmem:[#allocation10 + $0x10] sm:$0xff] %v2474
    %2483 = vst [vmem:[#allocation10 + $0x18] sm:$0xff] %v2475
    %2484 = vst [vmem:[#allocation10 + $0x20] sm:$0xff] %v2476
    %2485 = vst [vmem:[#allocation10 + $0x28] sm:$0xff] %v2477
    %2486 = vst [vmem:[#allocation10 + $0x30] sm:$0xff] %v2478
    %2487 = vst [vmem:[#allocation10 + $0x38] sm:$0xff] %v2479
    // Predicated region
    $region34: #{tpu_custom_call.1} parent=1 // pred_check
      _
    $region35: #{tpu_custom_call.1} parent=1 // pred_check_branch
      %2489 = sbr.rel (0) target = $region37
    $region36: #{tpu_custom_call.1} parent=1 // pred_region
      %s2491 = ssub.s32 1024, 1024
      %2492 = vsyncadd [#allocation4], %s2491
      %s2494 = sshll.u32 [#allocation10], 4
      %s2495 = int_to_ptr.vmem [resolvable:$true] %s2494
      %2497 = dma.vmem_to_hbm [thread:$0]  %s2495, 1024, %s4, [#allocation4]
    $region37: #{tpu_custom_call.1} parent=1 // pred_fallthru
      _
    // Predicated region
    $region38: #{tpu_custom_call.1} parent=1 // pred_check
      _
    $region39: #{tpu_custom_call.1} parent=1 // pred_check_branch
      %2499 = sbr.rel (0) target = $region41
    $region40: #{tpu_custom_call.1} parent=1 // pred_region
      %2500 = dma.done [#allocation4], 1024
    $region41: #{tpu_custom_call.1} parent=1 // pred_fallthru
      _
    %2501 = vsyncpa [#allocation3], 1
    %2502 = vsyncpa [#allocation6], 1
    %2503 = vsyncpa [#allocation9], 1
    %2504 = vsyncpa [#allocation4], 1

</llo_original>
